<compile_context>
chip_gen: v7x
topology: tpu7x:2x2x1
jax: 0.10.0
libtpu: 0.0.40
codegen_flags: <defaults>
</compile_context>

<pallas_src>
import functools

import jax
import jax.numpy as jnp
from jax.experimental import pallas as pl
from jax.experimental.pallas import tpu as pltpu


def _round_up(x, m):
    return (x + m - 1) // m * m


# ============================================================================
# Tiled matmul kernels (general / large-config path)
# ============================================================================
def _matmul_kernel_single_k(a_ref, w_ref, o_ref, *, apply_leaky):
    """Whole contraction in one K block: no accumulator scratch (review #3)."""
    acc = jnp.dot(a_ref[...], w_ref[...], preferred_element_type=jnp.float32)
    if apply_leaky:
        acc = jnp.where(acc >= 0.0, acc, 0.2 * acc)
    o_ref[...] = acc.astype(o_ref.dtype)


def _matmul_kernel_multi_k(a_ref, w_ref, o_ref, acc_ref, *, apply_leaky):
    k = pl.program_id(2)

    @pl.when(k == 0)
    def _():
        acc_ref[...] = jnp.zeros_like(acc_ref)

    acc_ref[...] += jnp.dot(a_ref[...], w_ref[...],
                            preferred_element_type=jnp.float32)

    @pl.when(k == pl.num_programs(2) - 1)
    def _():
        acc = acc_ref[...]
        if apply_leaky:
            acc = jnp.where(acc >= 0.0, acc, 0.2 * acc)
        o_ref[...] = acc.astype(o_ref.dtype)


def _pick_tiles(M, K, N):
    # tm: big-M layers get 512-row tiles (amortize per-step overhead, review #5);
    # otherwise aim for >=2 row blocks so both v7x TensorCores get work (review #7).
    if M >= 1024:
        tm = 512
    elif M >= 512:
        tm = 256
    elif M >= 32:
        tm = max(16, _round_up(pl.cdiv(M, 2), 16))
    else:
        tm = M
    # tn: lane-dense output blocks; callers already pad intermediate OC to 128 (review #4).
    tn = N if N <= 128 else (256 if N % 256 == 0 else 128)
    # tk: long contractions use 1024-wide K blocks -> fewer accumulator passes (review #7).
    if K <= 128:
        tk = K
    elif K >= 2048:
        tk = 1024
    else:
        tk = min(512, _round_up(K, 128))
    return tm, tn, tk


def pallas_matmul(a, w, apply_leaky, out_dtype):
    """a:[M,K] @ w:[K,N], bf16 MXU inputs, f32 accumulate, fused LeakyReLU(0.2)."""
    M, K = a.shape
    K2, N = w.shape
    assert K == K2
    # Activations/weights are already bf16 (cast once at the layer boundary,
    # review #8); these casts are a safety net only.
    if a.dtype != jnp.bfloat16:
        a = a.astype(jnp.bfloat16)
    if w.dtype != jnp.bfloat16:
        w = w.astype(jnp.bfloat16)

    tm, tn, tk = _pick_tiles(M, K, N)
    Kp = _round_up(K, tk)
    if Kp != K:   # zero-pad K so stale VMEM never enters the accumulation
        a = jnp.pad(a, ((0, 0), (0, Kp - K)))
        w = jnp.pad(w, ((0, Kp - K), (0, 0)))
    k_steps = Kp // tk
    gm, gn = pl.cdiv(M, tm), pl.cdiv(N, tn)

    out_itemsize = jnp.dtype(out_dtype).itemsize
    cost = pl.CostEstimate(flops=2 * M * K * N, transcendentals=0,
                           bytes_accessed=M * K * 2 + K * N * 2 + M * N * out_itemsize)

    # Scoped-VMEM estimate: double-buffered bf16 in/out blocks + f32 accumulator.
    vmem_est = (2 * (tm * tk + tk * tn) * 2 + 2 * tm * tn * out_itemsize
                + (tm * tn * 4 if k_steps > 1 else 0))
    cparams = {}
    if vmem_est > 12 * 2**20:   # only if tiles would outgrow v5e's 16 MiB default (review #6)
        cparams["vmem_limit_bytes"] = int(max(32 * 2**20,
                                              _round_up(vmem_est * 3 // 2, 2**20)))

    if k_steps == 1:
        return pl.pallas_call(
            functools.partial(_matmul_kernel_single_k, apply_leaky=apply_leaky),
            out_shape=jax.ShapeDtypeStruct((M, N), out_dtype),
            grid_spec=pltpu.PrefetchScalarGridSpec(
                num_scalar_prefetch=0,
                grid=(gm, gn),
                in_specs=[pl.BlockSpec((tm, Kp), lambda i, j: (i, 0)),
                          pl.BlockSpec((Kp, tn), lambda i, j: (0, j))],
                out_specs=pl.BlockSpec((tm, tn), lambda i, j: (i, j)),
            ),
            compiler_params=pltpu.CompilerParams(
                dimension_semantics=("parallel", "parallel"), **cparams),
            cost_estimate=cost,
        )(a, w)

    return pl.pallas_call(
        functools.partial(_matmul_kernel_multi_k, apply_leaky=apply_leaky),
        out_shape=jax.ShapeDtypeStruct((M, N), out_dtype),
        grid_spec=pltpu.PrefetchScalarGridSpec(
            num_scalar_prefetch=0,
            grid=(gm, gn, k_steps),
            in_specs=[pl.BlockSpec((tm, tk), lambda i, j, k: (i, k)),
                      pl.BlockSpec((tk, tn), lambda i, j, k: (k, j))],
            out_specs=pl.BlockSpec((tm, tn), lambda i, j, k: (i, j)),
            scratch_shapes=[pltpu.VMEM((tm, tn), jnp.float32)],
        ),
        compiler_params=pltpu.CompilerParams(
            dimension_semantics=("parallel", "parallel", "arbitrary"), **cparams),
        cost_estimate=cost,
    )(a, w)


# ============================================================================
# Conv layer (tiled path): NHWC, lane-dense im2col glue + Pallas matmul
# ============================================================================
def conv2d_nhwc_pallas(x, Wm, KH, KW, stride, padding, apply_leaky, out_dtype):
    """x:[N,H,W,C] NHWC (C possibly lane-padded with zeros), Wm:[KH*KW*C, OC_pad]."""
    n, H, W_, C = x.shape
    Krows, OCp = Wm.shape
    assert Krows == KH * KW * C
    OH = (H + 2 * padding - KH) // stride + 1
    OW = (W_ + 2 * padding - KW) // stride + 1

    if padding > 0:
        x = jnp.pad(x, ((0, 0), (padding, padding), (padding, padding), (0, 0)))

    if KH == 1 and KW == 1 and stride == 1:
        A = x.reshape(n * OH * OW, C)
    else:
        # im2col with channels kept as the fastest (lane) axis.
        # TODO(synk): fold this tap gather into the matmul kernel (iterate the KH*KW
        # taps on the K grid axis with strided-window DMA) so the ~KH*KW/stride^2 HBM
        # blowup of A is never materialized; only matters at large image sizes — the
        # shipped config takes the fully-fused single-kernel path instead.
        taps = [x[:, kh:kh + stride * OH:stride, kw:kw + stride * OW:stride, :]
                for kh in range(KH) for kw in range(KW)]
        A = jnp.concatenate(taps, axis=-1).reshape(n * OH * OW, KH * KW * C)

    out = pallas_matmul(A, Wm, apply_leaky, out_dtype)   # [n*OH*OW, OC_pad]
    return out.reshape(n, OH, OW, OCp)                   # NHWC feeds the next layer as-is


# ============================================================================
# One-time weight preprocessing (outside the jitted hot path, review #8)
# ============================================================================
def _layer_dims(nc, ndf, image_size):
    dims = []
    H, C = image_size, nc
    for mult in (1, 2, 4, 8):
        dims.append(dict(IC=C, OC=ndf * mult, KH=4, KW=4, stride=2, padding=1,
                         H=H, W=H, leaky=True))
        C, H = ndf * mult, H // 2
    k = image_size // 16
    dims.append(dict(IC=C, OC=1, KH=k, KW=k, stride=1, padding=0, H=H, W=H, leaky=False))
    return dims


def _prepare_tiled(weights, dims):
    """Per-layer [KH*KW*C_in_pad, OC_pad] bf16 weight matrices. Intermediate OC is
    zero-padded up to a multiple of 128 so every activation store is lane-dense
    (review #4); the next layer's K rows are padded with zeros to match, so the
    computed values are unchanged."""
    layers = []
    c_act = dims[0]["IC"]
    for w, d in zip(weights, dims):
        assert w.shape == (d["OC"], d["IC"], d["KH"], d["KW"])
        oc_pad = _round_up(d["OC"], 128) if d["leaky"] else d["OC"]
        wt = jnp.transpose(w, (2, 3, 1, 0))                                   # [KH,KW,IC,OC]
        wt = jnp.pad(wt, ((0, 0), (0, 0), (0, c_act - d["IC"]), (0, oc_pad - d["OC"])))
        Wm = wt.reshape(d["KH"] * d["KW"] * c_act, oc_pad).astype(jnp.bfloat16)
        layers.append(dict(Wm=Wm, KH=d["KH"], KW=d["KW"], stride=d["stride"],
                           padding=d["padding"], leaky=d["leaky"],
                           out_dtype=jnp.bfloat16 if d["leaky"] else jnp.float32))
        c_act = oc_pad
    return layers


def _conv_as_dense_matrix(w, H, W, stride, padding):
    """Exact Toeplitz expansion of one conv layer: flat NHWC input [H*W*IC] -> flat
    NHWC pre-activation output [OH*OW*OC]. Every entry is a single conv-weight value
    or 0, so casting it to bf16 is numerically identical to casting the conv weights."""
    OC, IC, KH, KW = w.shape
    OH = (H + 2 * padding - KH) // stride + 1
    OW = (W + 2 * padding - KW) // stride + 1
    rh = (jnp.arange(H)[None, :, None] ==
          stride * jnp.arange(OH)[None, None, :] + jnp.arange(KH)[:, None, None] - padding)
    rw = (jnp.arange(W)[None, :, None] ==
          stride * jnp.arange(OW)[None, None, :] + jnp.arange(KW)[:, None, None] - padding)
    B = jnp.einsum("ahy,bux,ocab->hucyxo",
                   rh.astype(jnp.float32), rw.astype(jnp.float32), w.astype(jnp.float32))
    return B.reshape(H * W * IC, OH * OW * OC)


def _prepare_fused(weights, dims):
    return [_conv_as_dense_matrix(w, d["H"], d["W"], d["stride"], d["padding"])
            .astype(jnp.bfloat16) for w, d in zip(weights, dims)]


def prepare_discriminator(weights, nc, ndf, image_size, mode="auto",
                          fused_weight_budget_bytes=8 * 2**20):
    """Preprocess OIHW conv weights once. mode="fused": whole net in one pallas_call
    (small configs); "tiled": per-layer im2col + tiled matmul; "auto": pick by the
    dense-expanded weight footprint (must fit comfortably in VMEM)."""
    dims = _layer_dims(nc, ndf, image_size)
    if mode == "auto":
        dense_bytes = 0
        for d in dims:
            OH = (d["H"] + 2 * d["padding"] - d["KH"]) // d["stride"] + 1
            OW = (d["W"] + 2 * d["padding"] - d["KW"]) // d["stride"] + 1
            dense_bytes += (d["H"] * d["W"] * d["IC"]) * (OH * OW * d["OC"]) * 2
        mode = "fused" if dense_bytes <= fused_weight_budget_bytes else "tiled"
    if mode == "fused":
        return {"mode": "fused", "mats": _prepare_fused(weights, dims)}
    return {"mode": "tiled", "layers": _prepare_tiled(weights, dims)}


# ============================================================================
# Fully-fused single-kernel forward (shipped tiny config, review #2)
# ============================================================================
def _fused_forward_kernel(x_ref, b1, b2, b3, b4, b5, o_ref):
    """Entire discriminator in one kernel: 5 chained MXU matmuls with fused
    LeakyReLU(0.2); every intermediate stays in VMEM/vregs. bf16 inputs, f32
    accumulation, bf16 re-quantization between layers (matches the tiled path)."""
    h = x_ref[...]                                            # [n, H*W*nc] bf16
    for b in (b1, b2, b3, b4):
        z = jnp.dot(h, b[...], preferred_element_type=jnp.float32)
        h = jnp.where(z >= 0.0, z, 0.2 * z).astype(jnp.bfloat16)
    o_ref[...] = jnp.dot(h, b5[...], preferred_element_type=jnp.float32)   # [n, 1]


def discriminator_forward_fused(mats, x):
    n = x.shape[0]
    # Single NCHW -> flat-NHWC transform + bf16 cast at the boundary.
    xf = jnp.transpose(x, (0, 2, 3, 1)).reshape(n, -1).astype(jnp.bfloat16)
    flops = 2 * n * sum(int(m.shape[0]) * int(m.shape[1]) for m in mats)
    bytes_accessed = int(xf.size) * 2 + sum(int(m.size) * 2 for m in mats) + n * 4
    # TODO(synk): for batches large enough to matter, add a leading "parallel" grid
    # axis over batch rows so both v7x TensorCores are used; at n=2 it is moot.
    out = pl.pallas_call(
        _fused_forward_kernel,
        out_shape=jax.ShapeDtypeStruct((n, 1), jnp.float32),
        in_specs=[pl.BlockSpec(memory_space=pltpu.MemorySpace.VMEM)] * 6,
        out_specs=pl.BlockSpec(memory_space=pltpu.MemorySpace.VMEM),
        cost_estimate=pl.CostEstimate(flops=flops, transcendentals=0,
                                      bytes_accessed=bytes_accessed),
    )(xf, *mats)
    return out.reshape(n, 1, 1, 1)


# ============================================================================
# Forward dispatch
# ============================================================================
def discriminator_forward_tiled(layers, x):
    # Single NCHW->NHWC transpose + bf16 cast at the boundary; all layers run NHWC bf16.
    h = jnp.transpose(x, (0, 2, 3, 1)).astype(jnp.bfloat16)
    for lyr in layers:
        h = conv2d_nhwc_pallas(h, lyr["Wm"], lyr["KH"], lyr["KW"], lyr["stride"],
                               lyr["padding"], lyr["leaky"], lyr["out_dtype"])
    return h.reshape(x.shape[0], 1, 1, 1)


def discriminator_forward(prep, x):
    """x: [N, C, H, W] (NCHW, PyTorch layout) -> [N, 1, 1, 1]."""
    if prep["mode"] == "fused":
        return discriminator_forward_fused(prep["mats"], x)
    return discriminator_forward_tiled(prep["layers"], x)


# ============================================================================
# Init + pure-JAX references for correctness checks
# ============================================================================
def init_params(key, nc, ndf, image_size):
    """Deterministic DCGAN-style init: N(0, 0.02) for all conv weights (OIHW)."""
    ks = jax.random.split(key, 5)
    shapes = [
        (ndf, nc, 4, 4),
        (ndf * 2, ndf, 4, 4),
        (ndf * 4, ndf * 2, 4, 4),
        (ndf * 8, ndf * 4, 4, 4),
        (1, ndf * 8, image_size // 16, image_size // 16),
    ]
    return [0.02 * jax.random.normal(k, s, dtype=jnp.float32) for k, s in zip(ks, shapes)]


def _conv_ref(x, w, stride, padding, compute_dtype):
    return jax.lax.conv_general_dilated(
        x.astype(compute_dtype), w.astype(compute_dtype),
        window_strides=(stride, stride),
        padding=[(padding, padding), (padding, padding)],
        dimension_numbers=("NCHW", "OIHW", "NCHW"),
        preferred_element_type=jnp.float32,
    )


def discriminator_ref(params, x, compute_dtype=jnp.float32):
    w1, w2, w3, w4, w5 = params
    lrelu = lambda z: jnp.where(z >= 0, z, 0.2 * z)
    h = x
    for w in (w1, w2, w3, w4):
        h = lrelu(_conv_ref(h, w, 2, 1, compute_dtype)).astype(compute_dtype)
    return _conv_ref(h, w5, 1, 0, compute_dtype)


if __name__ == "__main__":
    # Small config consistent with the module: nc=3, ndf=8, image_size=16, batch=2.
    batch, nc, ndf, image_size = 2, 3, 8, 16

    key = jax.random.PRNGKey(0)
    kx, kp = jax.random.split(key)
    x = jax.random.normal(kx, (batch, nc, image_size, image_size), dtype=jnp.float32)
    params = init_params(kp, nc, ndf, image_size)

    # Weight preprocessing happens once, outside the jitted forward.
    prep_fused = prepare_discriminator(params, nc, ndf, image_size, mode="auto")
    assert prep_fused["mode"] == "fused"
    prep_tiled = prepare_discriminator(params, nc, ndf, image_size, mode="tiled")

    fwd_fused = jax.jit(functools.partial(discriminator_forward, prep_fused))
    fwd_tiled = jax.jit(functools.partial(discriminator_forward, prep_tiled))

    out_fused = jax.block_until_ready(fwd_fused(x))
    out_tiled = jax.block_until_ready(fwd_tiled(x))
    assert out_fused.shape == (batch, 1, 1, 1), out_fused.shape
    assert out_tiled.shape == (batch, 1, 1, 1), out_tiled.shape

    # bf16-matched reference (tight) and fp32 reference (loose, bf16 budget).
    ref_bf16 = discriminator_ref(params, x, jnp.bfloat16)
    ref_f32 = discriminator_ref(params, x, jnp.float32)
    scale = float(jnp.max(jnp.abs(ref_f32))) + 1e-12

    def maxerr(a, b):
        return float(jnp.max(jnp.abs(a.astype(jnp.float32) - b.astype(jnp.float32))))

    assert maxerr(out_tiled, ref_bf16) <= 2e-2 * scale + 2e-6, (maxerr(out_tiled, ref_bf16), scale)
    assert maxerr(out_fused, ref_bf16) <= 5e-2 * scale + 5e-6, (maxerr(out_fused, ref_bf16), scale)
    assert maxerr(out_fused, out_tiled) <= 5e-2 * scale + 5e-6, (maxerr(out_fused, out_tiled), scale)
    assert maxerr(out_tiled, ref_f32) <= 2e-1 * scale + 5e-6, (maxerr(out_tiled, ref_f32), scale)
    assert maxerr(out_fused, ref_f32) <= 2e-1 * scale + 5e-6, (maxerr(out_fused, ref_f32), scale)

    print("KERNEL_OK")
</pallas_src>

<mosaic_0001>
module attributes {stable_mosaic.version = 11 : i64} {
  func.func @_fused_forward_kernel(%arg0: memref<2x768xbf16, #tpu.memory_space<vmem>>, %arg1: memref<768x512xbf16, #tpu.memory_space<vmem>>, %arg2: memref<512x256xbf16, #tpu.memory_space<vmem>>, %arg3: memref<256x128xbf16, #tpu.memory_space<vmem>>, %arg4: memref<128x64xbf16, #tpu.memory_space<vmem>>, %arg5: memref<64x1xbf16, #tpu.memory_space<vmem>>, %arg6: memref<2x1xf32, #tpu.memory_space<vmem>>) attributes {dimension_semantics = [], scalar_prefetch = 0 : i64, scratch_operands = 0 : i64, tpu.core_type = #tpu.core_type<tc>} {
    %c0 = arith.constant 0 : index
    %c0_0 = arith.constant 0 : index
    %0 = vector.load %arg0[%c0, %c0_0] : memref<2x768xbf16, #tpu.memory_space<vmem>>, vector<2x768xbf16>
    %c0_1 = arith.constant 0 : index
    %c0_2 = arith.constant 0 : index
    %1 = vector.load %arg1[%c0_1, %c0_2] : memref<768x512xbf16, #tpu.memory_space<vmem>>, vector<768x512xbf16>
    %cst = arith.constant dense<0.000000e+00> : vector<2x512xf32>
    %2 = tpu.matmul %0, %1, %cst {dimension_numbers = #tpu.dot_dimension_numbers<[1], [0], [0], [1], [0, 0, 1, 1], [], []>} : vector<2x768xbf16>, vector<768x512xbf16>, vector<2x512xf32> -> vector<2x512xf32>
    %cst_3 = arith.constant 0.000000e+00 : f32
    %3 = vector.broadcast %cst_3 : f32 to vector<2x512xf32>
    %4 = arith.cmpf oge, %2, %3 : vector<2x512xf32>
    %cst_4 = arith.constant 2.000000e-01 : f32
    %5 = vector.broadcast %cst_4 : f32 to vector<2x512xf32>
    %6 = arith.mulf %5, %2 : vector<2x512xf32>
    %7 = arith.select %4, %2, %6 : vector<2x512xi1>, vector<2x512xf32>
    %8 = arith.truncf %7 : vector<2x512xf32> to vector<2x512xbf16>
    %c0_5 = arith.constant 0 : index
    %c0_6 = arith.constant 0 : index
    %9 = vector.load %arg2[%c0_5, %c0_6] : memref<512x256xbf16, #tpu.memory_space<vmem>>, vector<512x256xbf16>
    %cst_7 = arith.constant dense<0.000000e+00> : vector<2x256xf32>
    %10 = tpu.matmul %8, %9, %cst_7 {dimension_numbers = #tpu.dot_dimension_numbers<[1], [0], [0], [1], [0, 0, 1, 1], [], []>} : vector<2x512xbf16>, vector<512x256xbf16>, vector<2x256xf32> -> vector<2x256xf32>
    %cst_8 = arith.constant 0.000000e+00 : f32
    %11 = vector.broadcast %cst_8 : f32 to vector<2x256xf32>
    %12 = arith.cmpf oge, %10, %11 : vector<2x256xf32>
    %cst_9 = arith.constant 2.000000e-01 : f32
    %13 = vector.broadcast %cst_9 : f32 to vector<2x256xf32>
    %14 = arith.mulf %13, %10 : vector<2x256xf32>
    %15 = arith.select %12, %10, %14 : vector<2x256xi1>, vector<2x256xf32>
    %16 = arith.truncf %15 : vector<2x256xf32> to vector<2x256xbf16>
    %c0_10 = arith.constant 0 : index
    %c0_11 = arith.constant 0 : index
    %17 = vector.load %arg3[%c0_10, %c0_11] : memref<256x128xbf16, #tpu.memory_space<vmem>>, vector<256x128xbf16>
    %cst_12 = arith.constant dense<0.000000e+00> : vector<2x128xf32>
    %18 = tpu.matmul %16, %17, %cst_12 {dimension_numbers = #tpu.dot_dimension_numbers<[1], [0], [0], [1], [0, 0, 1, 1], [], []>} : vector<2x256xbf16>, vector<256x128xbf16>, vector<2x128xf32> -> vector<2x128xf32>
    %cst_13 = arith.constant 0.000000e+00 : f32
    %19 = vector.broadcast %cst_13 : f32 to vector<2x128xf32>
    %20 = arith.cmpf oge, %18, %19 : vector<2x128xf32>
    %cst_14 = arith.constant 2.000000e-01 : f32
    %21 = vector.broadcast %cst_14 : f32 to vector<2x128xf32>
    %22 = arith.mulf %21, %18 : vector<2x128xf32>
    %23 = arith.select %20, %18, %22 : vector<2x128xi1>, vector<2x128xf32>
    %24 = arith.truncf %23 : vector<2x128xf32> to vector<2x128xbf16>
    %c0_15 = arith.constant 0 : index
    %c0_16 = arith.constant 0 : index
    %25 = vector.load %arg4[%c0_15, %c0_16] : memref<128x64xbf16, #tpu.memory_space<vmem>>, vector<128x64xbf16>
    %cst_17 = arith.constant dense<0.000000e+00> : vector<2x64xf32>
    %26 = tpu.matmul %24, %25, %cst_17 {dimension_numbers = #tpu.dot_dimension_numbers<[1], [0], [0], [1], [0, 0, 1, 1], [], []>} : vector<2x128xbf16>, vector<128x64xbf16>, vector<2x64xf32> -> vector<2x64xf32>
    %cst_18 = arith.constant 0.000000e+00 : f32
    %27 = vector.broadcast %cst_18 : f32 to vector<2x64xf32>
    %28 = arith.cmpf oge, %26, %27 : vector<2x64xf32>
    %cst_19 = arith.constant 2.000000e-01 : f32
    %29 = vector.broadcast %cst_19 : f32 to vector<2x64xf32>
    %30 = arith.mulf %29, %26 : vector<2x64xf32>
    %31 = arith.select %28, %26, %30 : vector<2x64xi1>, vector<2x64xf32>
    %32 = arith.truncf %31 : vector<2x64xf32> to vector<2x64xbf16>
    %c0_20 = arith.constant 0 : index
    %c0_21 = arith.constant 0 : index
    %33 = vector.load %arg5[%c0_20, %c0_21] : memref<64x1xbf16, #tpu.memory_space<vmem>>, vector<64x1xbf16>
    %cst_22 = arith.constant dense<0.000000e+00> : vector<2x1xf32>
    %34 = tpu.matmul %32, %33, %cst_22 {dimension_numbers = #tpu.dot_dimension_numbers<[1], [0], [0], [1], [0, 0, 1, 1], [], []>} : vector<2x64xbf16>, vector<64x1xbf16>, vector<2x1xf32> -> vector<2x1xf32>
    %c0_23 = arith.constant 0 : index
    %c0_24 = arith.constant 0 : index
    %35 = vector.load %arg6[%c0_23, %c0_24] : memref<2x1xf32, #tpu.memory_space<vmem>>, vector<2x1xf32>
    tpu.vector_store %arg6[%c0_23, %c0_24], %34 {strides = array<i32>} : memref<2x1xf32, #tpu.memory_space<vmem>>, vector<2x1xf32>,
    return
  }
}

</mosaic_0001>

<llo_original>
// kernel: discriminator_forward.1
$region0: #{discriminator_forward.1}
  #allocation0 [shape = 'u32[]', space=smem, size = 0x4, offset = 0x4, fixed_abs, tag = 'smem constant byte address 0x4 - core index']
  #allocation1 [shape = 'u32[144,128]{1,0:T(1,128)}', space=vmem, size = 0x12000, scoped, tag = 'internal scratch']
  %s0 = inlined_call_operand.vmem [shape: bf16[2,768], index: 0, kind: input, shape index: {}]
  %s1 = inlined_call_operand.vmem [shape: bf16[768,512], index: 1, kind: input, shape index: {}]
  %s2 = inlined_call_operand.vmem [shape: bf16[512,256], index: 2, kind: input, shape index: {}]
  %s3 = inlined_call_operand.vmem [shape: bf16[256,128], index: 3, kind: input, shape index: {}]
  %s4 = inlined_call_operand.vmem [shape: bf16[128,64], index: 4, kind: input, shape index: {}]
  %s5 = inlined_call_operand.vmem [shape: bf16[64,1], index: 5, kind: input, shape index: {}]
  %s6 = inlined_call_operand.vmem [shape: f32[2,1], index: 6, kind: output, shape index: {}]
  %s7 = sld [smem:[#allocation0]]
  $region34: #{discriminator_forward.1} parent=0
    _
  %s9 = ssub.s32 1, %s7
  %s10 = scalar_select 0, %s9, %s7
  // Predicated region
  $region2: #{discriminator_forward.1} parent=0 // pred_check
    _
  $region3: #{discriminator_forward.1} parent=0 // pred_check_branch
    %12 = sbr.rel (0) target = $region5
  $region4: #{discriminator_forward.1} parent=0 // pred_region
    _
  $region5: #{discriminator_forward.1} parent=0 // pred_fallthru
    _
  // Predicated region
  $region6: #{discriminator_forward.1} parent=0 // pred_check
    _
  $region7: #{discriminator_forward.1} parent=0 // pred_check_branch
    %14 = sbr.rel (0) target = $region9
  $region8: #{discriminator_forward.1} parent=0 // pred_region
    _
  $region9: #{discriminator_forward.1} parent=0 // pred_fallthru
    _
  // Predicated region
  $region10: #{discriminator_forward.1} parent=0 // pred_check
    _
  $region11: #{discriminator_forward.1} parent=0 // pred_check_branch
    %16 = sbr.rel (0) target = $region13
  $region12: #{discriminator_forward.1} parent=0 // pred_region
    _
  $region13: #{discriminator_forward.1} parent=0 // pred_fallthru
    _
  // Predicated region
  $region14: #{discriminator_forward.1} parent=0 // pred_check
    _
  $region15: #{discriminator_forward.1} parent=0 // pred_check_branch
    %18 = sbr.rel (0) target = $region17
  $region16: #{discriminator_forward.1} parent=0 // pred_region
    _
  $region17: #{discriminator_forward.1} parent=0 // pred_fallthru
    _
  // Predicated region
  $region18: #{discriminator_forward.1} parent=0 // pred_check
    _
  $region19: #{discriminator_forward.1} parent=0 // pred_check_branch
    %20 = sbr.rel (0) target = $region21
  $region20: #{discriminator_forward.1} parent=0 // pred_region
    _
  $region21: #{discriminator_forward.1} parent=0 // pred_fallthru
    _
  // Predicated region
  $region22: #{discriminator_forward.1} parent=0 // pred_check
    _
  $region23: #{discriminator_forward.1} parent=0 // pred_check_branch
    %22 = sbr.rel (0) target = $region25
  $region24: #{discriminator_forward.1} parent=0 // pred_region
    _
  $region25: #{discriminator_forward.1} parent=0 // pred_fallthru
    _
  %v24 = vld [vmem:[%s0] sm:$0x3f]
  %v25 = vld [vmem:[%s1] sm:$0xff]
  %v26 = vld [vmem:[%s1 + $0x8] sm:$0xff]
  %v27 = vld [vmem:[%s1 + $0x10] sm:$0xff]
  %v28 = vld [vmem:[%s1 + $0x18] sm:$0xff]
  %v29 = vld [vmem:[%s1 + $0x20] sm:$0xff]
  %v30 = vld [vmem:[%s1 + $0x28] sm:$0xff]
  %v31 = vld [vmem:[%s1 + $0x30] sm:$0xff]
  %v32 = vld [vmem:[%s1 + $0x38] sm:$0xff]
  %v33 = vld [vmem:[%s1 + $0x40] sm:$0xff]
  %v34 = vld [vmem:[%s1 + $0x48] sm:$0xff]
  %v35 = vld [vmem:[%s1 + $0x50] sm:$0xff]
  %v36 = vld [vmem:[%s1 + $0x58] sm:$0xff]
  %v37 = vld [vmem:[%s1 + $0x60] sm:$0xff]
  %v38 = vld [vmem:[%s1 + $0x68] sm:$0xff]
  %v39 = vld [vmem:[%s1 + $0x70] sm:$0xff]
  %v40 = vld [vmem:[%s1 + $0x78] sm:$0xff]
  %v41 = vld [vmem:[%s1 + $0x80] sm:$0xff]
  %v42 = vld [vmem:[%s1 + $0x88] sm:$0xff]
  %v43 = vld [vmem:[%s1 + $0x90] sm:$0xff]
  %v44 = vld [vmem:[%s1 + $0x98] sm:$0xff]
  %v45 = vld [vmem:[%s1 + $0xa0] sm:$0xff]
  %v46 = vld [vmem:[%s1 + $0xa8] sm:$0xff]
  %v47 = vld [vmem:[%s1 + $0xb0] sm:$0xff]
  %v48 = vld [vmem:[%s1 + $0xb8] sm:$0xff]
  %v49 = vld [vmem:[%s1 + $0xc0] sm:$0xff]
  %v50 = vld [vmem:[%s1 + $0xc8] sm:$0xff]
  %v51 = vld [vmem:[%s1 + $0xd0] sm:$0xff]
  %v52 = vld [vmem:[%s1 + $0xd8] sm:$0xff]
  %v53 = vld [vmem:[%s1 + $0xe0] sm:$0xff]
  %v54 = vld [vmem:[%s1 + $0xe8] sm:$0xff]
  %v55 = vld [vmem:[%s1 + $0xf0] sm:$0xff]
  %v56 = vld [vmem:[%s1 + $0xf8] sm:$0xff]
  %v57 = vld [vmem:[%s1 + $0x100] sm:$0xff]
  %v58 = vld [vmem:[%s1 + $0x108] sm:$0xff]
  %v59 = vld [vmem:[%s1 + $0x110] sm:$0xff]
  %v60 = vld [vmem:[%s1 + $0x118] sm:$0xff]
  %v61 = vld [vmem:[%s1 + $0x120] sm:$0xff]
  %v62 = vld [vmem:[%s1 + $0x128] sm:$0xff]
  %v63 = vld [vmem:[%s1 + $0x130] sm:$0xff]
  %v64 = vld [vmem:[%s1 + $0x138] sm:$0xff]
  %v65 = vld [vmem:[%s1 + $0x140] sm:$0xff]
  %v66 = vld [vmem:[%s1 + $0x148] sm:$0xff]
  %v67 = vld [vmem:[%s1 + $0x150] sm:$0xff]
  %v68 = vld [vmem:[%s1 + $0x158] sm:$0xff]
  %v69 = vld [vmem:[%s1 + $0x160] sm:$0xff]
  %v70 = vld [vmem:[%s1 + $0x168] sm:$0xff]
  %v71 = vld [vmem:[%s1 + $0x170] sm:$0xff]
  %v72 = vld [vmem:[%s1 + $0x178] sm:$0xff]
  %v73 = vld [vmem:[%s1 + $0x180] sm:$0xff]
  %v74 = vld [vmem:[%s1 + $0x188] sm:$0xff]
  %v75 = vld [vmem:[%s1 + $0x190] sm:$0xff]
  %v76 = vld [vmem:[%s1 + $0x198] sm:$0xff]
  %v77 = vld [vmem:[%s1 + $0x1a0] sm:$0xff]
  %v78 = vld [vmem:[%s1 + $0x1a8] sm:$0xff]
  %v79 = vld [vmem:[%s1 + $0x1b0] sm:$0xff]
  %v80 = vld [vmem:[%s1 + $0x1b8] sm:$0xff]
  %v81 = vld [vmem:[%s1 + $0x1c0] sm:$0xff]
  %v82 = vld [vmem:[%s1 + $0x1c8] sm:$0xff]
  %v83 = vld [vmem:[%s1 + $0x1d0] sm:$0xff]
  %v84 = vld [vmem:[%s1 + $0x1d8] sm:$0xff]
  %v85 = vld [vmem:[%s1 + $0x1e0] sm:$0xff]
  %v86 = vld [vmem:[%s1 + $0x1e8] sm:$0xff]
  %v87 = vld [vmem:[%s1 + $0x1f0] sm:$0xff]
  %v88 = vld [vmem:[%s1 + $0x1f8] sm:$0xff]
  %v89 = vld [vmem:[%s1 + $0x200] sm:$0xff]
  %v90 = vld [vmem:[%s1 + $0x208] sm:$0xff]
  %v91 = vld [vmem:[%s1 + $0x210] sm:$0xff]
  %v92 = vld [vmem:[%s1 + $0x218] sm:$0xff]
  %v93 = vld [vmem:[%s1 + $0x220] sm:$0xff]
  %v94 = vld [vmem:[%s1 + $0x228] sm:$0xff]
  %v95 = vld [vmem:[%s1 + $0x230] sm:$0xff]
  %v96 = vld [vmem:[%s1 + $0x238] sm:$0xff]
  %v97 = vld [vmem:[%s1 + $0x240] sm:$0xff]
  %v98 = vld [vmem:[%s1 + $0x248] sm:$0xff]
  %v99 = vld [vmem:[%s1 + $0x250] sm:$0xff]
  %v100 = vld [vmem:[%s1 + $0x258] sm:$0xff]
  %v101 = vld [vmem:[%s1 + $0x260] sm:$0xff]
  %v102 = vld [vmem:[%s1 + $0x268] sm:$0xff]
  %v103 = vld [vmem:[%s1 + $0x270] sm:$0xff]
  %v104 = vld [vmem:[%s1 + $0x278] sm:$0xff]
  %v105 = vld [vmem:[%s1 + $0x280] sm:$0xff]
  %v106 = vld [vmem:[%s1 + $0x288] sm:$0xff]
  %v107 = vld [vmem:[%s1 + $0x290] sm:$0xff]
  %v108 = vld [vmem:[%s1 + $0x298] sm:$0xff]
  %v109 = vld [vmem:[%s1 + $0x2a0] sm:$0xff]
  %v110 = vld [vmem:[%s1 + $0x2a8] sm:$0xff]
  %v111 = vld [vmem:[%s1 + $0x2b0] sm:$0xff]
  %v112 = vld [vmem:[%s1 + $0x2b8] sm:$0xff]
  %v113 = vld [vmem:[%s1 + $0x2c0] sm:$0xff]
  %v114 = vld [vmem:[%s1 + $0x2c8] sm:$0xff]
  %v115 = vld [vmem:[%s1 + $0x2d0] sm:$0xff]
  %v116 = vld [vmem:[%s1 + $0x2d8] sm:$0xff]
  %v117 = vld [vmem:[%s1 + $0x2e0] sm:$0xff]
  %v118 = vld [vmem:[%s1 + $0x2e8] sm:$0xff]
  %v119 = vld [vmem:[%s1 + $0x2f0] sm:$0xff]
  %v120 = vld [vmem:[%s1 + $0x2f8] sm:$0xff]
  %v121 = vld [vmem:[%s1 + $0x300] sm:$0xff]
  %v122 = vld [vmem:[%s1 + $0x308] sm:$0xff]
  %v123 = vld [vmem:[%s1 + $0x310] sm:$0xff]
  %v124 = vld [vmem:[%s1 + $0x318] sm:$0xff]
  %v125 = vld [vmem:[%s1 + $0x320] sm:$0xff]
  %v126 = vld [vmem:[%s1 + $0x328] sm:$0xff]
  %v127 = vld [vmem:[%s1 + $0x330] sm:$0xff]
  %v128 = vld [vmem:[%s1 + $0x338] sm:$0xff]
  %v129 = vld [vmem:[%s1 + $0x340] sm:$0xff]
  %v130 = vld [vmem:[%s1 + $0x348] sm:$0xff]
  %v131 = vld [vmem:[%s1 + $0x350] sm:$0xff]
  %v132 = vld [vmem:[%s1 + $0x358] sm:$0xff]
  %v133 = vld [vmem:[%s1 + $0x360] sm:$0xff]
  %v134 = vld [vmem:[%s1 + $0x368] sm:$0xff]
  %v135 = vld [vmem:[%s1 + $0x370] sm:$0xff]
  %v136 = vld [vmem:[%s1 + $0x378] sm:$0xff]
  %v137 = vld [vmem:[%s1 + $0x380] sm:$0xff]
  %v138 = vld [vmem:[%s1 + $0x388] sm:$0xff]
  %v139 = vld [vmem:[%s1 + $0x390] sm:$0xff]
  %v140 = vld [vmem:[%s1 + $0x398] sm:$0xff]
  %v141 = vld [vmem:[%s1 + $0x3a0] sm:$0xff]
  %v142 = vld [vmem:[%s1 + $0x3a8] sm:$0xff]
  %v143 = vld [vmem:[%s1 + $0x3b0] sm:$0xff]
  %v144 = vld [vmem:[%s1 + $0x3b8] sm:$0xff]
  %v145 = vld [vmem:[%s1 + $0x3c0] sm:$0xff]
  %v146 = vld [vmem:[%s1 + $0x3c8] sm:$0xff]
  %v147 = vld [vmem:[%s1 + $0x3d0] sm:$0xff]
  %v148 = vld [vmem:[%s1 + $0x3d8] sm:$0xff]
  %v149 = vld [vmem:[%s1 + $0x3e0] sm:$0xff]
  %v150 = vld [vmem:[%s1 + $0x3e8] sm:$0xff]
  %v151 = vld [vmem:[%s1 + $0x3f0] sm:$0xff]
  %v152 = vld [vmem:[%s1 + $0x3f8] sm:$0xff]
  %v153 = vld [vmem:[%s1 + $0x400] sm:$0xff]
  %v154 = vld [vmem:[%s1 + $0x408] sm:$0xff]
  %v155 = vld [vmem:[%s1 + $0x410] sm:$0xff]
  %v156 = vld [vmem:[%s1 + $0x418] sm:$0xff]
  %v157 = vld [vmem:[%s1 + $0x420] sm:$0xff]
  %v158 = vld [vmem:[%s1 + $0x428] sm:$0xff]
  %v159 = vld [vmem:[%s1 + $0x430] sm:$0xff]
  %v160 = vld [vmem:[%s1 + $0x438] sm:$0xff]
  %v161 = vld [vmem:[%s1 + $0x440] sm:$0xff]
  %v162 = vld [vmem:[%s1 + $0x448] sm:$0xff]
  %v163 = vld [vmem:[%s1 + $0x450] sm:$0xff]
  %v164 = vld [vmem:[%s1 + $0x458] sm:$0xff]
  %v165 = vld [vmem:[%s1 + $0x460] sm:$0xff]
  %v166 = vld [vmem:[%s1 + $0x468] sm:$0xff]
  %v167 = vld [vmem:[%s1 + $0x470] sm:$0xff]
  %v168 = vld [vmem:[%s1 + $0x478] sm:$0xff]
  %v169 = vld [vmem:[%s1 + $0x480] sm:$0xff]
  %v170 = vld [vmem:[%s1 + $0x488] sm:$0xff]
  %v171 = vld [vmem:[%s1 + $0x490] sm:$0xff]
  %v172 = vld [vmem:[%s1 + $0x498] sm:$0xff]
  %v173 = vld [vmem:[%s1 + $0x4a0] sm:$0xff]
  %v174 = vld [vmem:[%s1 + $0x4a8] sm:$0xff]
  %v175 = vld [vmem:[%s1 + $0x4b0] sm:$0xff]
  %v176 = vld [vmem:[%s1 + $0x4b8] sm:$0xff]
  %v177 = vld [vmem:[%s1 + $0x4c0] sm:$0xff]
  %v178 = vld [vmem:[%s1 + $0x4c8] sm:$0xff]
  %v179 = vld [vmem:[%s1 + $0x4d0] sm:$0xff]
  %v180 = vld [vmem:[%s1 + $0x4d8] sm:$0xff]
  %v181 = vld [vmem:[%s1 + $0x4e0] sm:$0xff]
  %v182 = vld [vmem:[%s1 + $0x4e8] sm:$0xff]
  %v183 = vld [vmem:[%s1 + $0x4f0] sm:$0xff]
  %v184 = vld [vmem:[%s1 + $0x4f8] sm:$0xff]
  %v185 = vld [vmem:[%s1 + $0x500] sm:$0xff]
  %v186 = vld [vmem:[%s1 + $0x508] sm:$0xff]
  %v187 = vld [vmem:[%s1 + $0x510] sm:$0xff]
  %v188 = vld [vmem:[%s1 + $0x518] sm:$0xff]
  %v189 = vld [vmem:[%s1 + $0x520] sm:$0xff]
  %v190 = vld [vmem:[%s1 + $0x528] sm:$0xff]
  %v191 = vld [vmem:[%s1 + $0x530] sm:$0xff]
  %v192 = vld [vmem:[%s1 + $0x538] sm:$0xff]
  %v193 = vld [vmem:[%s1 + $0x540] sm:$0xff]
  %v194 = vld [vmem:[%s1 + $0x548] sm:$0xff]
  %v195 = vld [vmem:[%s1 + $0x550] sm:$0xff]
  %v196 = vld [vmem:[%s1 + $0x558] sm:$0xff]
  %v197 = vld [vmem:[%s1 + $0x560] sm:$0xff]
  %v198 = vld [vmem:[%s1 + $0x568] sm:$0xff]
  %v199 = vld [vmem:[%s1 + $0x570] sm:$0xff]
  %v200 = vld [vmem:[%s1 + $0x578] sm:$0xff]
  %v201 = vld [vmem:[%s1 + $0x580] sm:$0xff]
  %v202 = vld [vmem:[%s1 + $0x588] sm:$0xff]
  %v203 = vld [vmem:[%s1 + $0x590] sm:$0xff]
  %v204 = vld [vmem:[%s1 + $0x598] sm:$0xff]
  %v205 = vld [vmem:[%s1 + $0x5a0] sm:$0xff]
  %v206 = vld [vmem:[%s1 + $0x5a8] sm:$0xff]
  %v207 = vld [vmem:[%s1 + $0x5b0] sm:$0xff]
  %v208 = vld [vmem:[%s1 + $0x5b8] sm:$0xff]
  %v209 = vld [vmem:[%s1 + $0x5c0] sm:$0xff]
  %v210 = vld [vmem:[%s1 + $0x5c8] sm:$0xff]
  %v211 = vld [vmem:[%s1 + $0x5d0] sm:$0xff]
  %v212 = vld [vmem:[%s1 + $0x5d8] sm:$0xff]
  %v213 = vld [vmem:[%s1 + $0x5e0] sm:$0xff]
  %v214 = vld [vmem:[%s1 + $0x5e8] sm:$0xff]
  %v215 = vld [vmem:[%s1 + $0x5f0] sm:$0xff]
  %v216 = vld [vmem:[%s1 + $0x5f8] sm:$0xff]
  %v218 = vcombine.high %v24, %v24
  %v220 = vunpack.c.l.s4 1966171168
  %v221 = vunpack.c.0.s8 %v220
  %v222 = vlaneseq
  %v223 = vshrl.u32 %v222, 7
  %v224 = vsub.s32 %v221, %v223
  %v225 = vrot.slane %v24, %v224
  %v227 = vunpack.c.l.s4 1966171168
  %v228 = vunpack.c.0.s8 %v227
  %v229 = vlaneseq
  %v230 = vshrl.u32 %v229, 7
  %v231 = vsub.s32 %v228, %v230
  %v232 = vrot.slane %v218, %v231
  %v233 = vcombine.high %v225, %v225
  %v234 = vcombine.high %v232, %v232
  %v236 = vunpack.c.l.s4 1966171168
  %v237 = vunpack.c.0.s8 %v236
  %v238 = vlaneseq
  %v239 = vshrl.u32 %v238, 7
  %v240 = vsub.s32 %v237, %v239
  %v241 = vrot.slane %v225, %v240
  %v243 = vunpack.c.l.s4 1966171168
  %v244 = vunpack.c.0.s8 %v243
  %v245 = vlaneseq
  %v246 = vshrl.u32 %v245, 7
  %v247 = vsub.s32 %v244, %v246
  %v248 = vrot.slane %v232, %v247
  %v250 = vunpack.c.l.s4 1966171168
  %v251 = vunpack.c.0.s8 %v250
  %v252 = vlaneseq
  %v253 = vshrl.u32 %v252, 7
  %v254 = vsub.s32 %v251, %v253
  %v255 = vrot.slane %v233, %v254
  %v257 = vunpack.c.l.s4 1966171168
  %v258 = vunpack.c.0.s8 %v257
  %v259 = vlaneseq
  %v260 = vshrl.u32 %v259, 7
  %v261 = vsub.s32 %v258, %v260
  %v262 = vrot.slane %v234, %v261
  %v263 = vcombine.high %v241, %v241
  %v264 = vcombine.high %v255, %v255
  %v463 = vunpack.c.l.b16 %v25
  %v464 = vunpack.c.h.b16 %v25
  %v465 = vunpack.c.l.b16 %v26
  %v466 = vunpack.c.h.b16 %v26
  %v467 = vunpack.c.l.b16 %v27
  %v468 = vunpack.c.h.b16 %v27
  %v469 = vunpack.c.l.b16 %v28
  %v470 = vunpack.c.h.b16 %v28
  %v471 = vunpack.c.l.b16 %v29
  %v472 = vunpack.c.h.b16 %v29
  %v473 = vunpack.c.l.b16 %v30
  %v474 = vunpack.c.h.b16 %v30
  %v475 = vunpack.c.l.b16 %v31
  %v476 = vunpack.c.h.b16 %v31
  %v477 = vunpack.c.l.b16 %v32
  %v478 = vunpack.c.h.b16 %v32
  %v479 = vunpack.c.l.b16 %v33
  %v480 = vunpack.c.h.b16 %v33
  %v481 = vunpack.c.l.b16 %v34
  %v482 = vunpack.c.h.b16 %v34
  %v483 = vunpack.c.l.b16 %v35
  %v484 = vunpack.c.h.b16 %v35
  %v485 = vunpack.c.l.b16 %v36
  %v486 = vunpack.c.h.b16 %v36
  %v487 = vunpack.c.l.b16 %v37
  %v488 = vunpack.c.h.b16 %v37
  %v489 = vunpack.c.l.b16 %v38
  %v490 = vunpack.c.h.b16 %v38
  %v491 = vunpack.c.l.b16 %v39
  %v492 = vunpack.c.h.b16 %v39
  %v493 = vunpack.c.l.b16 %v40
  %v494 = vunpack.c.h.b16 %v40
  %v495 = vunpack.c.l.b16 %v41
  %v496 = vunpack.c.h.b16 %v41
  %v497 = vunpack.c.l.b16 %v42
  %v498 = vunpack.c.h.b16 %v42
  %v499 = vunpack.c.l.b16 %v43
  %v500 = vunpack.c.h.b16 %v43
  %v501 = vunpack.c.l.b16 %v44
  %v502 = vunpack.c.h.b16 %v44
  %v503 = vunpack.c.l.b16 %v45
  %v504 = vunpack.c.h.b16 %v45
  %v505 = vunpack.c.l.b16 %v46
  %v506 = vunpack.c.h.b16 %v46
  %v507 = vunpack.c.l.b16 %v47
  %v508 = vunpack.c.h.b16 %v47
  %v509 = vunpack.c.l.b16 %v48
  %v510 = vunpack.c.h.b16 %v48
  %v511 = vunpack.c.l.b16 %v49
  %v512 = vunpack.c.h.b16 %v49
  %v513 = vunpack.c.l.b16 %v50
  %v514 = vunpack.c.h.b16 %v50
  %v515 = vunpack.c.l.b16 %v51
  %v516 = vunpack.c.h.b16 %v51
  %v517 = vunpack.c.l.b16 %v52
  %v518 = vunpack.c.h.b16 %v52
  %v519 = vunpack.c.l.b16 %v53
  %v520 = vunpack.c.h.b16 %v53
  %v521 = vunpack.c.l.b16 %v54
  %v522 = vunpack.c.h.b16 %v54
  %v523 = vunpack.c.l.b16 %v55
  %v524 = vunpack.c.h.b16 %v55
  %v525 = vunpack.c.l.b16 %v56
  %v526 = vunpack.c.h.b16 %v56
  %v527 = vunpack.c.l.b16 %v57
  %v528 = vunpack.c.h.b16 %v57
  %v529 = vunpack.c.l.b16 %v58
  %v530 = vunpack.c.h.b16 %v58
  %v531 = vunpack.c.l.b16 %v59
  %v532 = vunpack.c.h.b16 %v59
  %v533 = vunpack.c.l.b16 %v60
  %v534 = vunpack.c.h.b16 %v60
  %v535 = vunpack.c.l.b16 %v61
  %v536 = vunpack.c.h.b16 %v61
  %v537 = vunpack.c.l.b16 %v62
  %v538 = vunpack.c.h.b16 %v62
  %v539 = vunpack.c.l.b16 %v63
  %v540 = vunpack.c.h.b16 %v63
  %v541 = vunpack.c.l.b16 %v64
  %v542 = vunpack.c.h.b16 %v64
  %v543 = vunpack.c.l.b16 %v65
  %v544 = vunpack.c.h.b16 %v65
  %v545 = vunpack.c.l.b16 %v66
  %v546 = vunpack.c.h.b16 %v66
  %v547 = vunpack.c.l.b16 %v67
  %v548 = vunpack.c.h.b16 %v67
  %v549 = vunpack.c.l.b16 %v68
  %v550 = vunpack.c.h.b16 %v68
  %v551 = vunpack.c.l.b16 %v69
  %v552 = vunpack.c.h.b16 %v69
  %v553 = vunpack.c.l.b16 %v70
  %v554 = vunpack.c.h.b16 %v70
  %v555 = vunpack.c.l.b16 %v71
  %v556 = vunpack.c.h.b16 %v71
  %v557 = vunpack.c.l.b16 %v72
  %v558 = vunpack.c.h.b16 %v72
  %v559 = vunpack.c.l.b16 %v73
  %v560 = vunpack.c.h.b16 %v73
  %v561 = vunpack.c.l.b16 %v74
  %v562 = vunpack.c.h.b16 %v74
  %v563 = vunpack.c.l.b16 %v75
  %v564 = vunpack.c.h.b16 %v75
  %v565 = vunpack.c.l.b16 %v76
  %v566 = vunpack.c.h.b16 %v76
  %v567 = vunpack.c.l.b16 %v77
  %v568 = vunpack.c.h.b16 %v77
  %v569 = vunpack.c.l.b16 %v78
  %v570 = vunpack.c.h.b16 %v78
  %v571 = vunpack.c.l.b16 %v79
  %v572 = vunpack.c.h.b16 %v79
  %v573 = vunpack.c.l.b16 %v80
  %v574 = vunpack.c.h.b16 %v80
  %v575 = vunpack.c.l.b16 %v81
  %v576 = vunpack.c.h.b16 %v81
  %v577 = vunpack.c.l.b16 %v82
  %v578 = vunpack.c.h.b16 %v82
  %v579 = vunpack.c.l.b16 %v83
  %v580 = vunpack.c.h.b16 %v83
  %v581 = vunpack.c.l.b16 %v84
  %v582 = vunpack.c.h.b16 %v84
  %v583 = vunpack.c.l.b16 %v85
  %v584 = vunpack.c.h.b16 %v85
  %v585 = vunpack.c.l.b16 %v86
  %v586 = vunpack.c.h.b16 %v86
  %v587 = vunpack.c.l.b16 %v87
  %v588 = vunpack.c.h.b16 %v87
  %v589 = vunpack.c.l.b16 %v88
  %v590 = vunpack.c.h.b16 %v88
  %v591 = vunpack.c.l.b16 %v89
  %v592 = vunpack.c.h.b16 %v89
  %v593 = vunpack.c.l.b16 %v90
  %v594 = vunpack.c.h.b16 %v90
  %v595 = vunpack.c.l.b16 %v91
  %v596 = vunpack.c.h.b16 %v91
  %v597 = vunpack.c.l.b16 %v92
  %v598 = vunpack.c.h.b16 %v92
  %v599 = vunpack.c.l.b16 %v93
  %v600 = vunpack.c.h.b16 %v93
  %v601 = vunpack.c.l.b16 %v94
  %v602 = vunpack.c.h.b16 %v94
  %v603 = vunpack.c.l.b16 %v95
  %v604 = vunpack.c.h.b16 %v95
  %v605 = vunpack.c.l.b16 %v96
  %v606 = vunpack.c.h.b16 %v96
  %v607 = vunpack.c.l.b16 %v97
  %v608 = vunpack.c.h.b16 %v97
  %v609 = vunpack.c.l.b16 %v98
  %v610 = vunpack.c.h.b16 %v98
  %v611 = vunpack.c.l.b16 %v99
  %v612 = vunpack.c.h.b16 %v99
  %v613 = vunpack.c.l.b16 %v100
  %v614 = vunpack.c.h.b16 %v100
  %v615 = vunpack.c.l.b16 %v101
  %v616 = vunpack.c.h.b16 %v101
  %v617 = vunpack.c.l.b16 %v102
  %v618 = vunpack.c.h.b16 %v102
  %v619 = vunpack.c.l.b16 %v103
  %v620 = vunpack.c.h.b16 %v103
  %v621 = vunpack.c.l.b16 %v104
  %v622 = vunpack.c.h.b16 %v104
  %v623 = vunpack.c.l.b16 %v105
  %v624 = vunpack.c.h.b16 %v105
  %v625 = vunpack.c.l.b16 %v106
  %v626 = vunpack.c.h.b16 %v106
  %v627 = vunpack.c.l.b16 %v107
  %v628 = vunpack.c.h.b16 %v107
  %v629 = vunpack.c.l.b16 %v108
  %v630 = vunpack.c.h.b16 %v108
  %v631 = vunpack.c.l.b16 %v109
  %v632 = vunpack.c.h.b16 %v109
  %v633 = vunpack.c.l.b16 %v110
  %v634 = vunpack.c.h.b16 %v110
  %v635 = vunpack.c.l.b16 %v111
  %v636 = vunpack.c.h.b16 %v111
  %v637 = vunpack.c.l.b16 %v112
  %v638 = vunpack.c.h.b16 %v112
  %v639 = vunpack.c.l.b16 %v113
  %v640 = vunpack.c.h.b16 %v113
  %v641 = vunpack.c.l.b16 %v114
  %v642 = vunpack.c.h.b16 %v114
  %v643 = vunpack.c.l.b16 %v115
  %v644 = vunpack.c.h.b16 %v115
  %v645 = vunpack.c.l.b16 %v116
  %v646 = vunpack.c.h.b16 %v116
  %v647 = vunpack.c.l.b16 %v117
  %v648 = vunpack.c.h.b16 %v117
  %v649 = vunpack.c.l.b16 %v118
  %v650 = vunpack.c.h.b16 %v118
  %v651 = vunpack.c.l.b16 %v119
  %v652 = vunpack.c.h.b16 %v119
  %v653 = vunpack.c.l.b16 %v120
  %v654 = vunpack.c.h.b16 %v120
  %v655 = vunpack.c.l.b16 %v121
  %v656 = vunpack.c.h.b16 %v121
  %v657 = vunpack.c.l.b16 %v122
  %v658 = vunpack.c.h.b16 %v122
  %v659 = vunpack.c.l.b16 %v123
  %v660 = vunpack.c.h.b16 %v123
  %v661 = vunpack.c.l.b16 %v124
  %v662 = vunpack.c.h.b16 %v124
  %v663 = vunpack.c.l.b16 %v125
  %v664 = vunpack.c.h.b16 %v125
  %v665 = vunpack.c.l.b16 %v126
  %v666 = vunpack.c.h.b16 %v126
  %v667 = vunpack.c.l.b16 %v127
  %v668 = vunpack.c.h.b16 %v127
  %v669 = vunpack.c.l.b16 %v128
  %v670 = vunpack.c.h.b16 %v128
  %v671 = vunpack.c.l.b16 %v129
  %v672 = vunpack.c.h.b16 %v129
  %v673 = vunpack.c.l.b16 %v130
  %v674 = vunpack.c.h.b16 %v130
  %v675 = vunpack.c.l.b16 %v131
  %v676 = vunpack.c.h.b16 %v131
  %v677 = vunpack.c.l.b16 %v132
  %v678 = vunpack.c.h.b16 %v132
  %v679 = vunpack.c.l.b16 %v133
  %v680 = vunpack.c.h.b16 %v133
  %v681 = vunpack.c.l.b16 %v134
  %v682 = vunpack.c.h.b16 %v134
  %v683 = vunpack.c.l.b16 %v135
  %v684 = vunpack.c.h.b16 %v135
  %v685 = vunpack.c.l.b16 %v136
  %v686 = vunpack.c.h.b16 %v136
  %v687 = vunpack.c.l.b16 %v137
  %v688 = vunpack.c.h.b16 %v137
  %v689 = vunpack.c.l.b16 %v138
  %v690 = vunpack.c.h.b16 %v138
  %v691 = vunpack.c.l.b16 %v139
  %v692 = vunpack.c.h.b16 %v139
  %v693 = vunpack.c.l.b16 %v140
  %v694 = vunpack.c.h.b16 %v140
  %v695 = vunpack.c.l.b16 %v141
  %v696 = vunpack.c.h.b16 %v141
  %v697 = vunpack.c.l.b16 %v142
  %v698 = vunpack.c.h.b16 %v142
  %v699 = vunpack.c.l.b16 %v143
  %v700 = vunpack.c.h.b16 %v143
  %v701 = vunpack.c.l.b16 %v144
  %v702 = vunpack.c.h.b16 %v144
  %v703 = vunpack.c.l.b16 %v145
  %v704 = vunpack.c.h.b16 %v145
  %v705 = vunpack.c.l.b16 %v146
  %v706 = vunpack.c.h.b16 %v146
  %v707 = vunpack.c.l.b16 %v147
  %v708 = vunpack.c.h.b16 %v147
  %v709 = vunpack.c.l.b16 %v148
  %v710 = vunpack.c.h.b16 %v148
  %v711 = vunpack.c.l.b16 %v149
  %v712 = vunpack.c.h.b16 %v149
  %v713 = vunpack.c.l.b16 %v150
  %v714 = vunpack.c.h.b16 %v150
  %v715 = vunpack.c.l.b16 %v151
  %v716 = vunpack.c.h.b16 %v151
  %v717 = vunpack.c.l.b16 %v152
  %v718 = vunpack.c.h.b16 %v152
  %v719 = vunpack.c.l.b16 %v153
  %v720 = vunpack.c.h.b16 %v153
  %v721 = vunpack.c.l.b16 %v154
  %v722 = vunpack.c.h.b16 %v154
  %v723 = vunpack.c.l.b16 %v155
  %v724 = vunpack.c.h.b16 %v155
  %v725 = vunpack.c.l.b16 %v156
  %v726 = vunpack.c.h.b16 %v156
  %v727 = vunpack.c.l.b16 %v157
  %v728 = vunpack.c.h.b16 %v157
  %v729 = vunpack.c.l.b16 %v158
  %v730 = vunpack.c.h.b16 %v158
  %v731 = vunpack.c.l.b16 %v159
  %v732 = vunpack.c.h.b16 %v159
  %v733 = vunpack.c.l.b16 %v160
  %v734 = vunpack.c.h.b16 %v160
  %v735 = vunpack.c.l.b16 %v161
  %v736 = vunpack.c.h.b16 %v161
  %v737 = vunpack.c.l.b16 %v162
  %v738 = vunpack.c.h.b16 %v162
  %v739 = vunpack.c.l.b16 %v163
  %v740 = vunpack.c.h.b16 %v163
  %v741 = vunpack.c.l.b16 %v164
  %v742 = vunpack.c.h.b16 %v164
  %v743 = vunpack.c.l.b16 %v165
  %v744 = vunpack.c.h.b16 %v165
  %v745 = vunpack.c.l.b16 %v166
  %v746 = vunpack.c.h.b16 %v166
  %v747 = vunpack.c.l.b16 %v167
  %v748 = vunpack.c.h.b16 %v167
  %v749 = vunpack.c.l.b16 %v168
  %v750 = vunpack.c.h.b16 %v168
  %v751 = vunpack.c.l.b16 %v169
  %v752 = vunpack.c.h.b16 %v169
  %v753 = vunpack.c.l.b16 %v170
  %v754 = vunpack.c.h.b16 %v170
  %v755 = vunpack.c.l.b16 %v171
  %v756 = vunpack.c.h.b16 %v171
  %v757 = vunpack.c.l.b16 %v172
  %v758 = vunpack.c.h.b16 %v172
  %v759 = vunpack.c.l.b16 %v173
  %v760 = vunpack.c.h.b16 %v173
  %v761 = vunpack.c.l.b16 %v174
  %v762 = vunpack.c.h.b16 %v174
  %v763 = vunpack.c.l.b16 %v175
  %v764 = vunpack.c.h.b16 %v175
  %v765 = vunpack.c.l.b16 %v176
  %v766 = vunpack.c.h.b16 %v176
  %v767 = vunpack.c.l.b16 %v177
  %v768 = vunpack.c.h.b16 %v177
  %v769 = vunpack.c.l.b16 %v178
  %v770 = vunpack.c.h.b16 %v178
  %v771 = vunpack.c.l.b16 %v179
  %v772 = vunpack.c.h.b16 %v179
  %v773 = vunpack.c.l.b16 %v180
  %v774 = vunpack.c.h.b16 %v180
  %v775 = vunpack.c.l.b16 %v181
  %v776 = vunpack.c.h.b16 %v181
  %v777 = vunpack.c.l.b16 %v182
  %v778 = vunpack.c.h.b16 %v182
  %v779 = vunpack.c.l.b16 %v183
  %v780 = vunpack.c.h.b16 %v183
  %v781 = vunpack.c.l.b16 %v184
  %v782 = vunpack.c.h.b16 %v184
  %v783 = vunpack.c.l.b16 %v185
  %v784 = vunpack.c.h.b16 %v185
  %v785 = vunpack.c.l.b16 %v186
  %v786 = vunpack.c.h.b16 %v186
  %v787 = vunpack.c.l.b16 %v187
  %v788 = vunpack.c.h.b16 %v187
  %v789 = vunpack.c.l.b16 %v188
  %v790 = vunpack.c.h.b16 %v188
  %v791 = vunpack.c.l.b16 %v189
  %v792 = vunpack.c.h.b16 %v189
  %v793 = vunpack.c.l.b16 %v190
  %v794 = vunpack.c.h.b16 %v190
  %v795 = vunpack.c.l.b16 %v191
  %v796 = vunpack.c.h.b16 %v191
  %v797 = vunpack.c.l.b16 %v192
  %v798 = vunpack.c.h.b16 %v192
  %v799 = vunpack.c.l.b16 %v193
  %v800 = vunpack.c.h.b16 %v193
  %v801 = vunpack.c.l.b16 %v194
  %v802 = vunpack.c.h.b16 %v194
  %v803 = vunpack.c.l.b16 %v195
  %v804 = vunpack.c.h.b16 %v195
  %v805 = vunpack.c.l.b16 %v196
  %v806 = vunpack.c.h.b16 %v196
  %v807 = vunpack.c.l.b16 %v197
  %v808 = vunpack.c.h.b16 %v197
  %v809 = vunpack.c.l.b16 %v198
  %v810 = vunpack.c.h.b16 %v198
  %v811 = vunpack.c.l.b16 %v199
  %v812 = vunpack.c.h.b16 %v199
  %v813 = vunpack.c.l.b16 %v200
  %v814 = vunpack.c.h.b16 %v200
  %v815 = vunpack.c.l.b16 %v201
  %v816 = vunpack.c.h.b16 %v201
  %v817 = vunpack.c.l.b16 %v202
  %v818 = vunpack.c.h.b16 %v202
  %v819 = vunpack.c.l.b16 %v203
  %v820 = vunpack.c.h.b16 %v203
  %v821 = vunpack.c.l.b16 %v204
  %v822 = vunpack.c.h.b16 %v204
  %v823 = vunpack.c.l.b16 %v205
  %v824 = vunpack.c.h.b16 %v205
  %v825 = vunpack.c.l.b16 %v206
  %v826 = vunpack.c.h.b16 %v206
  %v827 = vunpack.c.l.b16 %v207
  %v828 = vunpack.c.h.b16 %v207
  %v829 = vunpack.c.l.b16 %v208
  %v830 = vunpack.c.h.b16 %v208
  %v831 = vunpack.c.l.b16 %v209
  %v832 = vunpack.c.h.b16 %v209
  %v833 = vunpack.c.l.b16 %v210
  %v834 = vunpack.c.h.b16 %v210
  %v835 = vunpack.c.l.b16 %v211
  %v836 = vunpack.c.h.b16 %v211
  %v837 = vunpack.c.l.b16 %v212
  %v838 = vunpack.c.h.b16 %v212
  %v839 = vunpack.c.l.b16 %v213
  %v840 = vunpack.c.h.b16 %v213
  %v841 = vunpack.c.l.b16 %v214
  %v842 = vunpack.c.h.b16 %v214
  %v843 = vunpack.c.l.b16 %v215
  %v844 = vunpack.c.h.b16 %v215
  %v845 = vunpack.c.l.b16 %v216
  %v846 = vunpack.c.h.b16 %v216
  %v847 = vpack.c.b16 %v467, %v463
  %v848 = vpack.c.b16 %v468, %v464
  %v849 = vpack.c.b16 %v469, %v465
  %v850 = vpack.c.b16 %v470, %v466
  %v851 = vpack.c.b16 %v475, %v471
  %v852 = vpack.c.b16 %v476, %v472
  %v853 = vpack.c.b16 %v477, %v473
  %v854 = vpack.c.b16 %v478, %v474
  %v855 = vpack.c.b16 %v483, %v479
  %v856 = vpack.c.b16 %v484, %v480
  %v857 = vpack.c.b16 %v485, %v481
  %v858 = vpack.c.b16 %v486, %v482
  %v859 = vpack.c.b16 %v491, %v487
  %v860 = vpack.c.b16 %v492, %v488
  %v861 = vpack.c.b16 %v493, %v489
  %v862 = vpack.c.b16 %v494, %v490
  %v863 = vpack.c.b16 %v499, %v495
  %v864 = vpack.c.b16 %v500, %v496
  %v865 = vpack.c.b16 %v501, %v497
  %v866 = vpack.c.b16 %v502, %v498
  %v867 = vpack.c.b16 %v507, %v503
  %v868 = vpack.c.b16 %v508, %v504
  %v869 = vpack.c.b16 %v509, %v505
  %v870 = vpack.c.b16 %v510, %v506
  %v871 = vpack.c.b16 %v515, %v511
  %v872 = vpack.c.b16 %v516, %v512
  %v873 = vpack.c.b16 %v517, %v513
  %v874 = vpack.c.b16 %v518, %v514
  %v875 = vpack.c.b16 %v523, %v519
  %v876 = vpack.c.b16 %v524, %v520
  %v877 = vpack.c.b16 %v525, %v521
  %v878 = vpack.c.b16 %v526, %v522
  %v879 = vpack.c.b16 %v531, %v527
  %v880 = vpack.c.b16 %v532, %v528
  %v881 = vpack.c.b16 %v533, %v529
  %v882 = vpack.c.b16 %v534, %v530
  %v883 = vpack.c.b16 %v539, %v535
  %v884 = vpack.c.b16 %v540, %v536
  %v885 = vpack.c.b16 %v541, %v537
  %v886 = vpack.c.b16 %v542, %v538
  %v887 = vpack.c.b16 %v547, %v543
  %v888 = vpack.c.b16 %v548, %v544
  %v889 = vpack.c.b16 %v549, %v545
  %v890 = vpack.c.b16 %v550, %v546
  %v891 = vpack.c.b16 %v555, %v551
  %v892 = vpack.c.b16 %v556, %v552
  %v893 = vpack.c.b16 %v557, %v553
  %v894 = vpack.c.b16 %v558, %v554
  %v895 = vpack.c.b16 %v563, %v559
  %v896 = vpack.c.b16 %v564, %v560
  %v897 = vpack.c.b16 %v565, %v561
  %v898 = vpack.c.b16 %v566, %v562
  %v899 = vpack.c.b16 %v571, %v567
  %v900 = vpack.c.b16 %v572, %v568
  %v901 = vpack.c.b16 %v573, %v569
  %v902 = vpack.c.b16 %v574, %v570
  %v903 = vpack.c.b16 %v579, %v575
  %v904 = vpack.c.b16 %v580, %v576
  %v905 = vpack.c.b16 %v581, %v577
  %v906 = vpack.c.b16 %v582, %v578
  %v907 = vpack.c.b16 %v587, %v583
  %v908 = vpack.c.b16 %v588, %v584
  %v909 = vpack.c.b16 %v589, %v585
  %v910 = vpack.c.b16 %v590, %v586
  %v911 = vpack.c.b16 %v595, %v591
  %v912 = vpack.c.b16 %v596, %v592
  %v913 = vpack.c.b16 %v597, %v593
  %v914 = vpack.c.b16 %v598, %v594
  %v915 = vpack.c.b16 %v603, %v599
  %v916 = vpack.c.b16 %v604, %v600
  %v917 = vpack.c.b16 %v605, %v601
  %v918 = vpack.c.b16 %v606, %v602
  %v919 = vpack.c.b16 %v611, %v607
  %v920 = vpack.c.b16 %v612, %v608
  %v921 = vpack.c.b16 %v613, %v609
  %v922 = vpack.c.b16 %v614, %v610
  %v923 = vpack.c.b16 %v619, %v615
  %v924 = vpack.c.b16 %v620, %v616
  %v925 = vpack.c.b16 %v621, %v617
  %v926 = vpack.c.b16 %v622, %v618
  %v927 = vpack.c.b16 %v627, %v623
  %v928 = vpack.c.b16 %v628, %v624
  %v929 = vpack.c.b16 %v629, %v625
  %v930 = vpack.c.b16 %v630, %v626
  %v931 = vpack.c.b16 %v635, %v631
  %v932 = vpack.c.b16 %v636, %v632
  %v933 = vpack.c.b16 %v637, %v633
  %v934 = vpack.c.b16 %v638, %v634
  %v935 = vpack.c.b16 %v643, %v639
  %v936 = vpack.c.b16 %v644, %v640
  %v937 = vpack.c.b16 %v645, %v641
  %v938 = vpack.c.b16 %v646, %v642
  %v939 = vpack.c.b16 %v651, %v647
  %v940 = vpack.c.b16 %v652, %v648
  %v941 = vpack.c.b16 %v653, %v649
  %v942 = vpack.c.b16 %v654, %v650
  %v943 = vpack.c.b16 %v659, %v655
  %v944 = vpack.c.b16 %v660, %v656
  %v945 = vpack.c.b16 %v661, %v657
  %v946 = vpack.c.b16 %v662, %v658
  %v947 = vpack.c.b16 %v667, %v663
  %v948 = vpack.c.b16 %v668, %v664
  %v949 = vpack.c.b16 %v669, %v665
  %v950 = vpack.c.b16 %v670, %v666
  %v951 = vpack.c.b16 %v675, %v671
  %v952 = vpack.c.b16 %v676, %v672
  %v953 = vpack.c.b16 %v677, %v673
  %v954 = vpack.c.b16 %v678, %v674
  %v955 = vpack.c.b16 %v683, %v679
  %v956 = vpack.c.b16 %v684, %v680
  %v957 = vpack.c.b16 %v685, %v681
  %v958 = vpack.c.b16 %v686, %v682
  %v959 = vpack.c.b16 %v691, %v687
  %v960 = vpack.c.b16 %v692, %v688
  %v961 = vpack.c.b16 %v693, %v689
  %v962 = vpack.c.b16 %v694, %v690
  %v963 = vpack.c.b16 %v699, %v695
  %v964 = vpack.c.b16 %v700, %v696
  %v965 = vpack.c.b16 %v701, %v697
  %v966 = vpack.c.b16 %v702, %v698
  %v967 = vpack.c.b16 %v707, %v703
  %v968 = vpack.c.b16 %v708, %v704
  %v969 = vpack.c.b16 %v709, %v705
  %v970 = vpack.c.b16 %v710, %v706
  %v971 = vpack.c.b16 %v715, %v711
  %v972 = vpack.c.b16 %v716, %v712
  %v973 = vpack.c.b16 %v717, %v713
  %v974 = vpack.c.b16 %v718, %v714
  %v975 = vpack.c.b16 %v723, %v719
  %v976 = vpack.c.b16 %v724, %v720
  %v977 = vpack.c.b16 %v725, %v721
  %v978 = vpack.c.b16 %v726, %v722
  %v979 = vpack.c.b16 %v731, %v727
  %v980 = vpack.c.b16 %v732, %v728
  %v981 = vpack.c.b16 %v733, %v729
  %v982 = vpack.c.b16 %v734, %v730
  %v983 = vpack.c.b16 %v739, %v735
  %v984 = vpack.c.b16 %v740, %v736
  %v985 = vpack.c.b16 %v741, %v737
  %v986 = vpack.c.b16 %v742, %v738
  %v987 = vpack.c.b16 %v747, %v743
  %v988 = vpack.c.b16 %v748, %v744
  %v989 = vpack.c.b16 %v749, %v745
  %v990 = vpack.c.b16 %v750, %v746
  %v991 = vpack.c.b16 %v755, %v751
  %v992 = vpack.c.b16 %v756, %v752
  %v993 = vpack.c.b16 %v757, %v753
  %v994 = vpack.c.b16 %v758, %v754
  %v995 = vpack.c.b16 %v763, %v759
  %v996 = vpack.c.b16 %v764, %v760
  %v997 = vpack.c.b16 %v765, %v761
  %v998 = vpack.c.b16 %v766, %v762
  %v999 = vpack.c.b16 %v771, %v767
  %v1000 = vpack.c.b16 %v772, %v768
  %v1001 = vpack.c.b16 %v773, %v769
  %v1002 = vpack.c.b16 %v774, %v770
  %v1003 = vpack.c.b16 %v779, %v775
  %v1004 = vpack.c.b16 %v780, %v776
  %v1005 = vpack.c.b16 %v781, %v777
  %v1006 = vpack.c.b16 %v782, %v778
  %v1007 = vpack.c.b16 %v787, %v783
  %v1008 = vpack.c.b16 %v788, %v784
  %v1009 = vpack.c.b16 %v789, %v785
  %v1010 = vpack.c.b16 %v790, %v786
  %v1011 = vpack.c.b16 %v795, %v791
  %v1012 = vpack.c.b16 %v796, %v792
  %v1013 = vpack.c.b16 %v797, %v793
  %v1014 = vpack.c.b16 %v798, %v794
  %v1015 = vpack.c.b16 %v803, %v799
  %v1016 = vpack.c.b16 %v804, %v800
  %v1017 = vpack.c.b16 %v805, %v801
  %v1018 = vpack.c.b16 %v806, %v802
  %v1019 = vpack.c.b16 %v811, %v807
  %v1020 = vpack.c.b16 %v812, %v808
  %v1021 = vpack.c.b16 %v813, %v809
  %v1022 = vpack.c.b16 %v814, %v810
  %v1023 = vpack.c.b16 %v819, %v815
  %v1024 = vpack.c.b16 %v820, %v816
  %v1025 = vpack.c.b16 %v821, %v817
  %v1026 = vpack.c.b16 %v822, %v818
  %v1027 = vpack.c.b16 %v827, %v823
  %v1028 = vpack.c.b16 %v828, %v824
  %v1029 = vpack.c.b16 %v829, %v825
  %v1030 = vpack.c.b16 %v830, %v826
  %v1031 = vpack.c.b16 %v835, %v831
  %v1032 = vpack.c.b16 %v836, %v832
  %v1033 = vpack.c.b16 %v837, %v833
  %v1034 = vpack.c.b16 %v838, %v834
  %v1035 = vpack.c.b16 %v843, %v839
  %v1036 = vpack.c.b16 %v844, %v840
  %v1037 = vpack.c.b16 %v845, %v841
  %v1038 = vpack.c.b16 %v846, %v842
  %1231 = vmatprep.subr.bf16.mxu0 %v848
  %1232 = vmatpush1.bf16.msra.mxu0 %v847
  %1233 = vmatprep.subr.bf16.mxu0 %v852
  %1234 = vmatpush1.bf16.msra.mxu0 %v851
  %1235 = vmatprep.subr.bf16.mxu0 %v856
  %1236 = vmatpush1.bf16.msra.mxu0 %v855
  %1237 = vmatprep.subr.bf16.mxu0 %v860
  %1238 = vmatpush1.bf16.msra.mxu0 %v859
  %1239 = vmatprep.subr.bf16.mxu0 %v864
  %1240 = vmatpush1.bf16.msra.mxu0 %v863
  %1241 = vmatprep.subr.bf16.mxu0 %v868
  %1242 = vmatpush1.bf16.msra.mxu0 %v867
  %1243 = vmatprep.subr.bf16.mxu0 %v872
  %1244 = vmatpush1.bf16.msra.mxu0 %v871
  %1245 = vmatprep.subr.bf16.mxu0 %v876
  %1246 = vmatpush1.bf16.msra.mxu0 %v875
  %1247 = vmatprep.subr.bf16.mxu0 %v880
  %1248 = vmatpush1.bf16.msra.mxu0 %v879
  %1249 = vmatprep.subr.bf16.mxu0 %v884
  %1250 = vmatpush1.bf16.msra.mxu0 %v883
  %1251 = vmatprep.subr.bf16.mxu0 %v888
  %1252 = vmatpush1.bf16.msra.mxu0 %v887
  %1253 = vmatprep.subr.bf16.mxu0 %v892
  %1254 = vmatpush1.bf16.msra.mxu0 %v891
  %1255 = vmatprep.subr.bf16.mxu0 %v896
  %1256 = vmatpush1.bf16.msra.mxu0 %v895
  %1257 = vmatprep.subr.bf16.mxu0 %v900
  %1258 = vmatpush1.bf16.msra.mxu0 %v899
  %1259 = vmatprep.subr.bf16.mxu0 %v904
  %1260 = vmatpush1.bf16.msra.mxu0 %v903
  %1261 = vmatprep.subr.bf16.mxu0 %v908
  %1262 = vmatpush1.bf16.msra.mxu0 %v907
  %1263 = vmatprep.mubr.bf16.mxu0 %v255
  %1264 = vmatmul.mubr.bf16.gmra.mrb[0].mxu0 %v241
  %v1265 = vpop.f32.mrb[0].mxu0
  %v1266 = vadd.f32 0.0, %v1265
  %v1267 = vpop.f32.mrb[0].mxu0
  %v1268 = vadd.f32 0.0, %v1267
  %v1269 = vpop.f32.mrb[0].mxu0
  %v1270 = vpop.f32.mrb[0].mxu0
  %1271 = vdwg.mxu0
  %1272 = vmatprep.subr.bf16.mxu0 %v912
  %1273 = vmatpush1.bf16.msra.mxu0 %v911
  %1274 = vmatprep.subr.bf16.mxu0 %v916
  %1275 = vmatpush1.bf16.msra.mxu0 %v915
  %1276 = vmatprep.subr.bf16.mxu0 %v920
  %1277 = vmatpush1.bf16.msra.mxu0 %v919
  %1278 = vmatprep.subr.bf16.mxu0 %v924
  %1279 = vmatpush1.bf16.msra.mxu0 %v923
  %1280 = vmatprep.subr.bf16.mxu0 %v928
  %1281 = vmatpush1.bf16.msra.mxu0 %v927
  %1282 = vmatprep.subr.bf16.mxu0 %v932
  %1283 = vmatpush1.bf16.msra.mxu0 %v931
  %1284 = vmatprep.subr.bf16.mxu0 %v936
  %1285 = vmatpush1.bf16.msra.mxu0 %v935
  %1286 = vmatprep.subr.bf16.mxu0 %v940
  %1287 = vmatpush1.bf16.msra.mxu0 %v939
  %1288 = vmatprep.subr.bf16.mxu0 %v944
  %1289 = vmatpush1.bf16.msra.mxu0 %v943
  %1290 = vmatprep.subr.bf16.mxu0 %v948
  %1291 = vmatpush1.bf16.msra.mxu0 %v947
  %1292 = vmatprep.subr.bf16.mxu0 %v952
  %1293 = vmatpush1.bf16.msra.mxu0 %v951
  %1294 = vmatprep.subr.bf16.mxu0 %v956
  %1295 = vmatpush1.bf16.msra.mxu0 %v955
  %1296 = vmatprep.subr.bf16.mxu0 %v960
  %1297 = vmatpush1.bf16.msra.mxu0 %v959
  %1298 = vmatprep.subr.bf16.mxu0 %v964
  %1299 = vmatpush1.bf16.msra.mxu0 %v963
  %1300 = vmatprep.subr.bf16.mxu0 %v968
  %1301 = vmatpush1.bf16.msra.mxu0 %v967
  %1302 = vmatprep.subr.bf16.mxu0 %v972
  %1303 = vmatpush1.bf16.msra.mxu0 %v971
  %1304 = vmatprep.mubr.bf16.mxu0 %v264
  %1305 = vmatmul.mubr.bf16.gmra.mrb[0].mxu0 %v263
  %v1306 = vpop.f32.mrb[0].mxu0
  %v1307 = vadd.f32 %v1266, %v1306
  %v1308 = vpop.f32.mrb[0].mxu0
  %v1309 = vadd.f32 %v1268, %v1308
  %v1310 = vpop.f32.mrb[0].mxu0
  %v1311 = vpop.f32.mrb[0].mxu0
  %1312 = vdwg.mxu0
  %1313 = vmatprep.subr.bf16.mxu0 %v976
  %1314 = vmatpush1.bf16.msra.mxu0 %v975
  %1315 = vmatprep.subr.bf16.mxu0 %v980
  %1316 = vmatpush1.bf16.msra.mxu0 %v979
  %1317 = vmatprep.subr.bf16.mxu0 %v984
  %1318 = vmatpush1.bf16.msra.mxu0 %v983
  %1319 = vmatprep.subr.bf16.mxu0 %v988
  %1320 = vmatpush1.bf16.msra.mxu0 %v987
  %1321 = vmatprep.subr.bf16.mxu0 %v992
  %1322 = vmatpush1.bf16.msra.mxu0 %v991
  %1323 = vmatprep.subr.bf16.mxu0 %v996
  %1324 = vmatpush1.bf16.msra.mxu0 %v995
  %1325 = vmatprep.subr.bf16.mxu0 %v1000
  %1326 = vmatpush1.bf16.msra.mxu0 %v999
  %1327 = vmatprep.subr.bf16.mxu0 %v1004
  %1328 = vmatpush1.bf16.msra.mxu0 %v1003
  %1329 = vmatprep.subr.bf16.mxu0 %v1008
  %1330 = vmatpush1.bf16.msra.mxu0 %v1007
  %1331 = vmatprep.subr.bf16.mxu0 %v1012
  %1332 = vmatpush1.bf16.msra.mxu0 %v1011
  %1333 = vmatprep.subr.bf16.mxu0 %v1016
  %1334 = vmatpush1.bf16.msra.mxu0 %v1015
  %1335 = vmatprep.subr.bf16.mxu0 %v1020
  %1336 = vmatpush1.bf16.msra.mxu0 %v1019
  %1337 = vmatprep.subr.bf16.mxu0 %v1024
  %1338 = vmatpush1.bf16.msra.mxu0 %v1023
  %1339 = vmatprep.subr.bf16.mxu0 %v1028
  %1340 = vmatpush1.bf16.msra.mxu0 %v1027
  %1341 = vmatprep.subr.bf16.mxu0 %v1032
  %1342 = vmatpush1.bf16.msra.mxu0 %v1031
  %1343 = vmatprep.subr.bf16.mxu0 %v1036
  %1344 = vmatpush1.bf16.msra.mxu0 %v1035
  %1345 = vmatprep.mubr.bf16.mxu0 %v262
  %1346 = vmatmul.mubr.bf16.gmra.mrb[0].mxu0 %v248
  %v1347 = vpop.f32.mrb[0].mxu0
  %v1348 = vadd.f32 %v1307, %v1347
  %v1349 = vpop.f32.mrb[0].mxu0
  %v1350 = vadd.f32 %v1309, %v1349
  %v1351 = vpop.f32.mrb[0].mxu0
  %v1352 = vpop.f32.mrb[0].mxu0
  %1353 = vdwg.mxu0
  %1354 = vmatprep.subr.bf16.mxu0 %v850
  %1355 = vmatpush1.bf16.msra.mxu0 %v849
  %1356 = vmatprep.subr.bf16.mxu0 %v854
  %1357 = vmatpush1.bf16.msra.mxu0 %v853
  %1358 = vmatprep.subr.bf16.mxu0 %v858
  %1359 = vmatpush1.bf16.msra.mxu0 %v857
  %1360 = vmatprep.subr.bf16.mxu0 %v862
  %1361 = vmatpush1.bf16.msra.mxu0 %v861
  %1362 = vmatprep.subr.bf16.mxu0 %v866
  %1363 = vmatpush1.bf16.msra.mxu0 %v865
  %1364 = vmatprep.subr.bf16.mxu0 %v870
  %1365 = vmatpush1.bf16.msra.mxu0 %v869
  %1366 = vmatprep.subr.bf16.mxu0 %v874
  %1367 = vmatpush1.bf16.msra.mxu0 %v873
  %1368 = vmatprep.subr.bf16.mxu0 %v878
  %1369 = vmatpush1.bf16.msra.mxu0 %v877
  %1370 = vmatprep.subr.bf16.mxu0 %v882
  %1371 = vmatpush1.bf16.msra.mxu0 %v881
  %1372 = vmatprep.subr.bf16.mxu0 %v886
  %1373 = vmatpush1.bf16.msra.mxu0 %v885
  %1374 = vmatprep.subr.bf16.mxu0 %v890
  %1375 = vmatpush1.bf16.msra.mxu0 %v889
  %1376 = vmatprep.subr.bf16.mxu0 %v894
  %1377 = vmatpush1.bf16.msra.mxu0 %v893
  %1378 = vmatprep.subr.bf16.mxu0 %v898
  %1379 = vmatpush1.bf16.msra.mxu0 %v897
  %1380 = vmatprep.subr.bf16.mxu0 %v902
  %1381 = vmatpush1.bf16.msra.mxu0 %v901
  %1382 = vmatprep.subr.bf16.mxu0 %v906
  %1383 = vmatpush1.bf16.msra.mxu0 %v905
  %1384 = vmatprep.subr.bf16.mxu0 %v910
  %1385 = vmatpush1.bf16.msra.mxu0 %v909
  %1386 = vmatprep.mubr.bf16.mxu0 %v255
  %1387 = vmatmul.mubr.bf16.gmra.mrb[0].mxu0 %v241
  %v1388 = vpop.f32.mrb[0].mxu0
  %v1389 = vadd.f32 0.0, %v1388
  %v1390 = vpop.f32.mrb[0].mxu0
  %v1391 = vadd.f32 0.0, %v1390
  %v1392 = vpop.f32.mrb[0].mxu0
  %v1393 = vpop.f32.mrb[0].mxu0
  %1394 = vdwg.mxu0
  %1395 = vmatprep.subr.bf16.mxu0 %v914
  %1396 = vmatpush1.bf16.msra.mxu0 %v913
  %1397 = vmatprep.subr.bf16.mxu0 %v918
  %1398 = vmatpush1.bf16.msra.mxu0 %v917
  %1399 = vmatprep.subr.bf16.mxu0 %v922
  %1400 = vmatpush1.bf16.msra.mxu0 %v921
  %1401 = vmatprep.subr.bf16.mxu0 %v926
  %1402 = vmatpush1.bf16.msra.mxu0 %v925
  %1403 = vmatprep.subr.bf16.mxu0 %v930
  %1404 = vmatpush1.bf16.msra.mxu0 %v929
  %1405 = vmatprep.subr.bf16.mxu0 %v934
  %1406 = vmatpush1.bf16.msra.mxu0 %v933
  %1407 = vmatprep.subr.bf16.mxu0 %v938
  %1408 = vmatpush1.bf16.msra.mxu0 %v937
  %1409 = vmatprep.subr.bf16.mxu0 %v942
  %1410 = vmatpush1.bf16.msra.mxu0 %v941
  %1411 = vmatprep.subr.bf16.mxu0 %v946
  %1412 = vmatpush1.bf16.msra.mxu0 %v945
  %1413 = vmatprep.subr.bf16.mxu0 %v950
  %1414 = vmatpush1.bf16.msra.mxu0 %v949
  %1415 = vmatprep.subr.bf16.mxu0 %v954
  %1416 = vmatpush1.bf16.msra.mxu0 %v953
  %1417 = vmatprep.subr.bf16.mxu0 %v958
  %1418 = vmatpush1.bf16.msra.mxu0 %v957
  %1419 = vmatprep.subr.bf16.mxu0 %v962
  %1420 = vmatpush1.bf16.msra.mxu0 %v961
  %1421 = vmatprep.subr.bf16.mxu0 %v966
  %1422 = vmatpush1.bf16.msra.mxu0 %v965
  %1423 = vmatprep.subr.bf16.mxu0 %v970
  %1424 = vmatpush1.bf16.msra.mxu0 %v969
  %1425 = vmatprep.subr.bf16.mxu0 %v974
  %1426 = vmatpush1.bf16.msra.mxu0 %v973
  %1427 = vmatprep.mubr.bf16.mxu0 %v264
  %1428 = vmatmul.mubr.bf16.gmra.mrb[0].mxu0 %v263
  %v1429 = vpop.f32.mrb[0].mxu0
  %v1430 = vadd.f32 %v1389, %v1429
  %v1431 = vpop.f32.mrb[0].mxu0
  %v1432 = vadd.f32 %v1391, %v1431
  %v1433 = vpop.f32.mrb[0].mxu0
  %v1434 = vpop.f32.mrb[0].mxu0
  %1435 = vdwg.mxu0
  %1436 = vmatprep.subr.bf16.mxu0 %v978
  %1437 = vmatpush1.bf16.msra.mxu0 %v977
  %1438 = vmatprep.subr.bf16.mxu0 %v982
  %1439 = vmatpush1.bf16.msra.mxu0 %v981
  %1440 = vmatprep.subr.bf16.mxu0 %v986
  %1441 = vmatpush1.bf16.msra.mxu0 %v985
  %1442 = vmatprep.subr.bf16.mxu0 %v990
  %1443 = vmatpush1.bf16.msra.mxu0 %v989
  %1444 = vmatprep.subr.bf16.mxu0 %v994
  %1445 = vmatpush1.bf16.msra.mxu0 %v993
  %1446 = vmatprep.subr.bf16.mxu0 %v998
  %1447 = vmatpush1.bf16.msra.mxu0 %v997
  %1448 = vmatprep.subr.bf16.mxu0 %v1002
  %1449 = vmatpush1.bf16.msra.mxu0 %v1001
  %1450 = vmatprep.subr.bf16.mxu0 %v1006
  %1451 = vmatpush1.bf16.msra.mxu0 %v1005
  %1452 = vmatprep.subr.bf16.mxu0 %v1010
  %1453 = vmatpush1.bf16.msra.mxu0 %v1009
  %1454 = vmatprep.subr.bf16.mxu0 %v1014
  %1455 = vmatpush1.bf16.msra.mxu0 %v1013
  %1456 = vmatprep.subr.bf16.mxu0 %v1018
  %1457 = vmatpush1.bf16.msra.mxu0 %v1017
  %1458 = vmatprep.subr.bf16.mxu0 %v1022
  %1459 = vmatpush1.bf16.msra.mxu0 %v1021
  %1460 = vmatprep.subr.bf16.mxu0 %v1026
  %1461 = vmatpush1.bf16.msra.mxu0 %v1025
  %1462 = vmatprep.subr.bf16.mxu0 %v1030
  %1463 = vmatpush1.bf16.msra.mxu0 %v1029
  %1464 = vmatprep.subr.bf16.mxu0 %v1034
  %1465 = vmatpush1.bf16.msra.mxu0 %v1033
  %1466 = vmatprep.subr.bf16.mxu0 %v1038
  %1467 = vmatpush1.bf16.msra.mxu0 %v1037
  %1468 = vmatprep.mubr.bf16.mxu0 %v262
  %1469 = vmatmul.mubr.bf16.gmra.mrb[0].mxu0 %v248
  %v1470 = vpop.f32.mrb[0].mxu0
  %v1471 = vadd.f32 %v1430, %v1470
  %v1472 = vpop.f32.mrb[0].mxu0
  %v1473 = vadd.f32 %v1432, %v1472
  %v1474 = vpop.f32.mrb[0].mxu0
  %v1475 = vpop.f32.mrb[0].mxu0
  %1476 = vdwg.mxu0
  %vm1477 = vcmp.ge.f32.partialorder %v1348, 0.0
  %vm1478 = vcmp.ge.f32.partialorder %v1350, 0.0
  %vm1479 = vcmp.ge.f32.partialorder %v1471, 0.0
  %vm1480 = vcmp.ge.f32.partialorder %v1473, 0.0
  %v1481 = vmul.f32 %v1348, 0.2
  %v1482 = vmul.f32 %v1350, 0.2
  %v1483 = vmul.f32 %v1471, 0.2
  %v1484 = vmul.f32 %v1473, 0.2
  %v1485 = vsel %vm1477, %v1348, %v1481
  %v1486 = vsel %vm1478, %v1350, %v1482
  %v1487 = vsel %vm1479, %v1471, %v1483
  %v1488 = vsel %vm1480, %v1473, %v1484
  %v1489 = vpack.c.bf16 %v1485, %v1485
  %v1490 = vpack.c.bf16 %v1486, %v1486
  %v1491 = vpack.c.bf16 %v1487, %v1487
  %v1492 = vpack.c.bf16 %v1488, %v1488
  %v1493 = vld [vmem:[%s2] sm:$0xff]
  %v1494 = vld [vmem:[%s2 + $0x8] sm:$0xff]
  %v1495 = vld [vmem:[%s2 + $0x10] sm:$0xff]
  %v1496 = vld [vmem:[%s2 + $0x18] sm:$0xff]
  %v1497 = vld [vmem:[%s2 + $0x20] sm:$0xff]
  %v1498 = vld [vmem:[%s2 + $0x28] sm:$0xff]
  %v1499 = vld [vmem:[%s2 + $0x30] sm:$0xff]
  %v1500 = vld [vmem:[%s2 + $0x38] sm:$0xff]
  %v1501 = vld [vmem:[%s2 + $0x40] sm:$0xff]
  %v1502 = vld [vmem:[%s2 + $0x48] sm:$0xff]
  %v1503 = vld [vmem:[%s2 + $0x50] sm:$0xff]
  %v1504 = vld [vmem:[%s2 + $0x58] sm:$0xff]
  %v1505 = vld [vmem:[%s2 + $0x60] sm:$0xff]
  %v1506 = vld [vmem:[%s2 + $0x68] sm:$0xff]
  %v1507 = vld [vmem:[%s2 + $0x70] sm:$0xff]
  %v1508 = vld [vmem:[%s2 + $0x78] sm:$0xff]
  %v1509 = vld [vmem:[%s2 + $0x80] sm:$0xff]
  %v1510 = vld [vmem:[%s2 + $0x88] sm:$0xff]
  %v1511 = vld [vmem:[%s2 + $0x90] sm:$0xff]
  %v1512 = vld [vmem:[%s2 + $0x98] sm:$0xff]
  %v1513 = vld [vmem:[%s2 + $0xa0] sm:$0xff]
  %v1514 = vld [vmem:[%s2 + $0xa8] sm:$0xff]
  %v1515 = vld [vmem:[%s2 + $0xb0] sm:$0xff]
  %v1516 = vld [vmem:[%s2 + $0xb8] sm:$0xff]
  %v1517 = vld [vmem:[%s2 + $0xc0] sm:$0xff]
  %v1518 = vld [vmem:[%s2 + $0xc8] sm:$0xff]
  %v1519 = vld [vmem:[%s2 + $0xd0] sm:$0xff]
  %v1520 = vld [vmem:[%s2 + $0xd8] sm:$0xff]
  %v1521 = vld [vmem:[%s2 + $0xe0] sm:$0xff]
  %v1522 = vld [vmem:[%s2 + $0xe8] sm:$0xff]
  %v1523 = vld [vmem:[%s2 + $0xf0] sm:$0xff]
  %v1524 = vld [vmem:[%s2 + $0xf8] sm:$0xff]
  %v1525 = vld [vmem:[%s2 + $0x100] sm:$0xff]
  %v1526 = vld [vmem:[%s2 + $0x108] sm:$0xff]
  %v1527 = vld [vmem:[%s2 + $0x110] sm:$0xff]
  %v1528 = vld [vmem:[%s2 + $0x118] sm:$0xff]
  %v1529 = vld [vmem:[%s2 + $0x120] sm:$0xff]
  %v1530 = vld [vmem:[%s2 + $0x128] sm:$0xff]
  %v1531 = vld [vmem:[%s2 + $0x130] sm:$0xff]
  %v1532 = vld [vmem:[%s2 + $0x138] sm:$0xff]
  %v1533 = vld [vmem:[%s2 + $0x140] sm:$0xff]
  %v1534 = vld [vmem:[%s2 + $0x148] sm:$0xff]
  %v1535 = vld [vmem:[%s2 + $0x150] sm:$0xff]
  %v1536 = vld [vmem:[%s2 + $0x158] sm:$0xff]
  %v1537 = vld [vmem:[%s2 + $0x160] sm:$0xff]
  %v1538 = vld [vmem:[%s2 + $0x168] sm:$0xff]
  %v1539 = vld [vmem:[%s2 + $0x170] sm:$0xff]
  %v1540 = vld [vmem:[%s2 + $0x178] sm:$0xff]
  %v1541 = vld [vmem:[%s2 + $0x180] sm:$0xff]
  %v1542 = vld [vmem:[%s2 + $0x188] sm:$0xff]
  %v1543 = vld [vmem:[%s2 + $0x190] sm:$0xff]
  %v1544 = vld [vmem:[%s2 + $0x198] sm:$0xff]
  %v1545 = vld [vmem:[%s2 + $0x1a0] sm:$0xff]
  %v1546 = vld [vmem:[%s2 + $0x1a8] sm:$0xff]
  %v1547 = vld [vmem:[%s2 + $0x1b0] sm:$0xff]
  %v1548 = vld [vmem:[%s2 + $0x1b8] sm:$0xff]
  %v1549 = vld [vmem:[%s2 + $0x1c0] sm:$0xff]
  %v1550 = vld [vmem:[%s2 + $0x1c8] sm:$0xff]
  %v1551 = vld [vmem:[%s2 + $0x1d0] sm:$0xff]
  %v1552 = vld [vmem:[%s2 + $0x1d8] sm:$0xff]
  %v1553 = vld [vmem:[%s2 + $0x1e0] sm:$0xff]
  %v1554 = vld [vmem:[%s2 + $0x1e8] sm:$0xff]
  %v1555 = vld [vmem:[%s2 + $0x1f0] sm:$0xff]
  %v1556 = vld [vmem:[%s2 + $0x1f8] sm:$0xff]
  %v1621 = vunpack.c.l.b16 %v1493
  %v1622 = vunpack.c.h.b16 %v1493
  %v1623 = vunpack.c.l.b16 %v1494
  %v1624 = vunpack.c.h.b16 %v1494
  %v1625 = vunpack.c.l.b16 %v1495
  %v1626 = vunpack.c.h.b16 %v1495
  %v1627 = vunpack.c.l.b16 %v1496
  %v1628 = vunpack.c.h.b16 %v1496
  %v1629 = vunpack.c.l.b16 %v1497
  %v1630 = vunpack.c.h.b16 %v1497
  %v1631 = vunpack.c.l.b16 %v1498
  %v1632 = vunpack.c.h.b16 %v1498
  %v1633 = vunpack.c.l.b16 %v1499
  %v1634 = vunpack.c.h.b16 %v1499
  %v1635 = vunpack.c.l.b16 %v1500
  %v1636 = vunpack.c.h.b16 %v1500
  %v1637 = vunpack.c.l.b16 %v1501
  %v1638 = vunpack.c.h.b16 %v1501
  %v1639 = vunpack.c.l.b16 %v1502
  %v1640 = vunpack.c.h.b16 %v1502
  %v1641 = vunpack.c.l.b16 %v1503
  %v1642 = vunpack.c.h.b16 %v1503
  %v1643 = vunpack.c.l.b16 %v1504
  %v1644 = vunpack.c.h.b16 %v1504
  %v1645 = vunpack.c.l.b16 %v1505
  %v1646 = vunpack.c.h.b16 %v1505
  %v1647 = vunpack.c.l.b16 %v1506
  %v1648 = vunpack.c.h.b16 %v1506
  %v1649 = vunpack.c.l.b16 %v1507
  %v1650 = vunpack.c.h.b16 %v1507
  %v1651 = vunpack.c.l.b16 %v1508
  %v1652 = vunpack.c.h.b16 %v1508
  %v1653 = vunpack.c.l.b16 %v1509
  %v1654 = vunpack.c.h.b16 %v1509
  %v1655 = vunpack.c.l.b16 %v1510
  %v1656 = vunpack.c.h.b16 %v1510
  %v1657 = vunpack.c.l.b16 %v1511
  %v1658 = vunpack.c.h.b16 %v1511
  %v1659 = vunpack.c.l.b16 %v1512
  %v1660 = vunpack.c.h.b16 %v1512
  %v1661 = vunpack.c.l.b16 %v1513
  %v1662 = vunpack.c.h.b16 %v1513
  %v1663 = vunpack.c.l.b16 %v1514
  %v1664 = vunpack.c.h.b16 %v1514
  %v1665 = vunpack.c.l.b16 %v1515
  %v1666 = vunpack.c.h.b16 %v1515
  %v1667 = vunpack.c.l.b16 %v1516
  %v1668 = vunpack.c.h.b16 %v1516
  %v1669 = vunpack.c.l.b16 %v1517
  %v1670 = vunpack.c.h.b16 %v1517
  %v1671 = vunpack.c.l.b16 %v1518
  %v1672 = vunpack.c.h.b16 %v1518
  %v1673 = vunpack.c.l.b16 %v1519
  %v1674 = vunpack.c.h.b16 %v1519
  %v1675 = vunpack.c.l.b16 %v1520
  %v1676 = vunpack.c.h.b16 %v1520
  %v1677 = vunpack.c.l.b16 %v1521
  %v1678 = vunpack.c.h.b16 %v1521
  %v1679 = vunpack.c.l.b16 %v1522
  %v1680 = vunpack.c.h.b16 %v1522
  %v1681 = vunpack.c.l.b16 %v1523
  %v1682 = vunpack.c.h.b16 %v1523
  %v1683 = vunpack.c.l.b16 %v1524
  %v1684 = vunpack.c.h.b16 %v1524
  %v1685 = vunpack.c.l.b16 %v1525
  %v1686 = vunpack.c.h.b16 %v1525
  %v1687 = vunpack.c.l.b16 %v1526
  %v1688 = vunpack.c.h.b16 %v1526
  %v1689 = vunpack.c.l.b16 %v1527
  %v1690 = vunpack.c.h.b16 %v1527
  %v1691 = vunpack.c.l.b16 %v1528
  %v1692 = vunpack.c.h.b16 %v1528
  %v1693 = vunpack.c.l.b16 %v1529
  %v1694 = vunpack.c.h.b16 %v1529
  %v1695 = vunpack.c.l.b16 %v1530
  %v1696 = vunpack.c.h.b16 %v1530
  %v1697 = vunpack.c.l.b16 %v1531
  %v1698 = vunpack.c.h.b16 %v1531
  %v1699 = vunpack.c.l.b16 %v1532
  %v1700 = vunpack.c.h.b16 %v1532
  %v1701 = vunpack.c.l.b16 %v1533
  %v1702 = vunpack.c.h.b16 %v1533
  %v1703 = vunpack.c.l.b16 %v1534
  %v1704 = vunpack.c.h.b16 %v1534
  %v1705 = vunpack.c.l.b16 %v1535
  %v1706 = vunpack.c.h.b16 %v1535
  %v1707 = vunpack.c.l.b16 %v1536
  %v1708 = vunpack.c.h.b16 %v1536
  %v1709 = vunpack.c.l.b16 %v1537
  %v1710 = vunpack.c.h.b16 %v1537
  %v1711 = vunpack.c.l.b16 %v1538
  %v1712 = vunpack.c.h.b16 %v1538
  %v1713 = vunpack.c.l.b16 %v1539
  %v1714 = vunpack.c.h.b16 %v1539
  %v1715 = vunpack.c.l.b16 %v1540
  %v1716 = vunpack.c.h.b16 %v1540
  %v1717 = vunpack.c.l.b16 %v1541
  %v1718 = vunpack.c.h.b16 %v1541
  %v1719 = vunpack.c.l.b16 %v1542
  %v1720 = vunpack.c.h.b16 %v1542
  %v1721 = vunpack.c.l.b16 %v1543
  %v1722 = vunpack.c.h.b16 %v1543
  %v1723 = vunpack.c.l.b16 %v1544
  %v1724 = vunpack.c.h.b16 %v1544
  %v1725 = vunpack.c.l.b16 %v1545
  %v1726 = vunpack.c.h.b16 %v1545
  %v1727 = vunpack.c.l.b16 %v1546
  %v1728 = vunpack.c.h.b16 %v1546
  %v1729 = vunpack.c.l.b16 %v1547
  %v1730 = vunpack.c.h.b16 %v1547
  %v1731 = vunpack.c.l.b16 %v1548
  %v1732 = vunpack.c.h.b16 %v1548
  %v1733 = vunpack.c.l.b16 %v1549
  %v1734 = vunpack.c.h.b16 %v1549
  %v1735 = vunpack.c.l.b16 %v1550
  %v1736 = vunpack.c.h.b16 %v1550
  %v1737 = vunpack.c.l.b16 %v1551
  %v1738 = vunpack.c.h.b16 %v1551
  %v1739 = vunpack.c.l.b16 %v1552
  %v1740 = vunpack.c.h.b16 %v1552
  %v1741 = vunpack.c.l.b16 %v1553
  %v1742 = vunpack.c.h.b16 %v1553
  %v1743 = vunpack.c.l.b16 %v1554
  %v1744 = vunpack.c.h.b16 %v1554
  %v1745 = vunpack.c.l.b16 %v1555
  %v1746 = vunpack.c.h.b16 %v1555
  %v1747 = vunpack.c.l.b16 %v1556
  %v1748 = vunpack.c.h.b16 %v1556
  %v1749 = vpack.c.b16 %v1623, %v1621
  %v1750 = vpack.c.b16 %v1624, %v1622
  %v1751 = vpack.c.b16 %v1627, %v1625
  %v1752 = vpack.c.b16 %v1628, %v1626
  %v1753 = vpack.c.b16 %v1631, %v1629
  %v1754 = vpack.c.b16 %v1632, %v1630
  %v1755 = vpack.c.b16 %v1635, %v1633
  %v1756 = vpack.c.b16 %v1636, %v1634
  %v1757 = vpack.c.b16 %v1639, %v1637
  %v1758 = vpack.c.b16 %v1640, %v1638
  %v1759 = vpack.c.b16 %v1643, %v1641
  %v1760 = vpack.c.b16 %v1644, %v1642
  %v1761 = vpack.c.b16 %v1647, %v1645
  %v1762 = vpack.c.b16 %v1648, %v1646
  %v1763 = vpack.c.b16 %v1651, %v1649
  %v1764 = vpack.c.b16 %v1652, %v1650
  %v1765 = vpack.c.b16 %v1655, %v1653
  %v1766 = vpack.c.b16 %v1656, %v1654
  %v1767 = vpack.c.b16 %v1659, %v1657
  %v1768 = vpack.c.b16 %v1660, %v1658
  %v1769 = vpack.c.b16 %v1663, %v1661
  %v1770 = vpack.c.b16 %v1664, %v1662
  %v1771 = vpack.c.b16 %v1667, %v1665
  %v1772 = vpack.c.b16 %v1668, %v1666
  %v1773 = vpack.c.b16 %v1671, %v1669
  %v1774 = vpack.c.b16 %v1672, %v1670
  %v1775 = vpack.c.b16 %v1675, %v1673
  %v1776 = vpack.c.b16 %v1676, %v1674
  %v1777 = vpack.c.b16 %v1679, %v1677
  %v1778 = vpack.c.b16 %v1680, %v1678
  %v1779 = vpack.c.b16 %v1683, %v1681
  %v1780 = vpack.c.b16 %v1684, %v1682
  %v1781 = vpack.c.b16 %v1687, %v1685
  %v1782 = vpack.c.b16 %v1688, %v1686
  %v1783 = vpack.c.b16 %v1691, %v1689
  %v1784 = vpack.c.b16 %v1692, %v1690
  %v1785 = vpack.c.b16 %v1695, %v1693
  %v1786 = vpack.c.b16 %v1696, %v1694
  %v1787 = vpack.c.b16 %v1699, %v1697
  %v1788 = vpack.c.b16 %v1700, %v1698
  %v1789 = vpack.c.b16 %v1703, %v1701
  %v1790 = vpack.c.b16 %v1704, %v1702
  %v1791 = vpack.c.b16 %v1707, %v1705
  %v1792 = vpack.c.b16 %v1708, %v1706
  %v1793 = vpack.c.b16 %v1711, %v1709
  %v1794 = vpack.c.b16 %v1712, %v1710
  %v1795 = vpack.c.b16 %v1715, %v1713
  %v1796 = vpack.c.b16 %v1716, %v1714
  %v1797 = vpack.c.b16 %v1719, %v1717
  %v1798 = vpack.c.b16 %v1720, %v1718
  %v1799 = vpack.c.b16 %v1723, %v1721
  %v1800 = vpack.c.b16 %v1724, %v1722
  %v1801 = vpack.c.b16 %v1727, %v1725
  %v1802 = vpack.c.b16 %v1728, %v1726
  %v1803 = vpack.c.b16 %v1731, %v1729
  %v1804 = vpack.c.b16 %v1732, %v1730
  %v1805 = vpack.c.b16 %v1735, %v1733
  %v1806 = vpack.c.b16 %v1736, %v1734
  %v1807 = vpack.c.b16 %v1739, %v1737
  %v1808 = vpack.c.b16 %v1740, %v1738
  %v1809 = vpack.c.b16 %v1743, %v1741
  %v1810 = vpack.c.b16 %v1744, %v1742
  %v1811 = vpack.c.b16 %v1747, %v1745
  %v1812 = vpack.c.b16 %v1748, %v1746
  %1877 = vmatprep.subr.bf16.mxu0 %v1750
  %1878 = vmatpush1.bf16.msra.mxu0 %v1749
  %1879 = vmatprep.subr.bf16.mxu0 %v1752
  %1880 = vmatpush1.bf16.msra.mxu0 %v1751
  %1881 = vmatprep.subr.bf16.mxu0 %v1754
  %1882 = vmatpush1.bf16.msra.mxu0 %v1753
  %1883 = vmatprep.subr.bf16.mxu0 %v1756
  %1884 = vmatpush1.bf16.msra.mxu0 %v1755
  %1885 = vmatprep.subr.bf16.mxu0 %v1758
  %1886 = vmatpush1.bf16.msra.mxu0 %v1757
  %1887 = vmatprep.subr.bf16.mxu0 %v1760
  %1888 = vmatpush1.bf16.msra.mxu0 %v1759
  %1889 = vmatprep.subr.bf16.mxu0 %v1762
  %1890 = vmatpush1.bf16.msra.mxu0 %v1761
  %1891 = vmatprep.subr.bf16.mxu0 %v1764
  %1892 = vmatpush1.bf16.msra.mxu0 %v1763
  %1893 = vmatprep.subr.bf16.mxu0 %v1766
  %1894 = vmatpush1.bf16.msra.mxu0 %v1765
  %1895 = vmatprep.subr.bf16.mxu0 %v1768
  %1896 = vmatpush1.bf16.msra.mxu0 %v1767
  %1897 = vmatprep.subr.bf16.mxu0 %v1770
  %1898 = vmatpush1.bf16.msra.mxu0 %v1769
  %1899 = vmatprep.subr.bf16.mxu0 %v1772
  %1900 = vmatpush1.bf16.msra.mxu0 %v1771
  %1901 = vmatprep.subr.bf16.mxu0 %v1774
  %1902 = vmatpush1.bf16.msra.mxu0 %v1773
  %1903 = vmatprep.subr.bf16.mxu0 %v1776
  %1904 = vmatpush1.bf16.msra.mxu0 %v1775
  %1905 = vmatprep.subr.bf16.mxu0 %v1778
  %1906 = vmatpush1.bf16.msra.mxu0 %v1777
  %1907 = vmatprep.subr.bf16.mxu0 %v1780
  %1908 = vmatpush1.bf16.msra.mxu0 %v1779
  %1909 = vmatprep.mubr.bf16.mxu0 %v1490
  %1910 = vmatmul.mubr.bf16.gmra.mrb[0].mxu0 %v1489
  %v1911 = vpop.f32.mrb[0].mxu0
  %v1912 = vadd.f32 0.0, %v1911
  %v1913 = vpop.f32.mrb[0].mxu0
  %v1914 = vadd.f32 0.0, %v1913
  %v1915 = vpop.f32.mrb[0].mxu0
  %v1916 = vpop.f32.mrb[0].mxu0
  %1917 = vdwg.mxu0
  %1918 = vmatprep.subr.bf16.mxu0 %v1782
  %1919 = vmatpush1.bf16.msra.mxu0 %v1781
  %1920 = vmatprep.subr.bf16.mxu0 %v1784
  %1921 = vmatpush1.bf16.msra.mxu0 %v1783
  %1922 = vmatprep.subr.bf16.mxu0 %v1786
  %1923 = vmatpush1.bf16.msra.mxu0 %v1785
  %1924 = vmatprep.subr.bf16.mxu0 %v1788
  %1925 = vmatpush1.bf16.msra.mxu0 %v1787
  %1926 = vmatprep.subr.bf16.mxu0 %v1790
  %1927 = vmatpush1.bf16.msra.mxu0 %v1789
  %1928 = vmatprep.subr.bf16.mxu0 %v1792
  %1929 = vmatpush1.bf16.msra.mxu0 %v1791
  %1930 = vmatprep.subr.bf16.mxu0 %v1794
  %1931 = vmatpush1.bf16.msra.mxu0 %v1793
  %1932 = vmatprep.subr.bf16.mxu0 %v1796
  %1933 = vmatpush1.bf16.msra.mxu0 %v1795
  %1934 = vmatprep.subr.bf16.mxu0 %v1798
  %1935 = vmatpush1.bf16.msra.mxu0 %v1797
  %1936 = vmatprep.subr.bf16.mxu0 %v1800
  %1937 = vmatpush1.bf16.msra.mxu0 %v1799
  %1938 = vmatprep.subr.bf16.mxu0 %v1802
  %1939 = vmatpush1.bf16.msra.mxu0 %v1801
  %1940 = vmatprep.subr.bf16.mxu0 %v1804
  %1941 = vmatpush1.bf16.msra.mxu0 %v1803
  %1942 = vmatprep.subr.bf16.mxu0 %v1806
  %1943 = vmatpush1.bf16.msra.mxu0 %v1805
  %1944 = vmatprep.subr.bf16.mxu0 %v1808
  %1945 = vmatpush1.bf16.msra.mxu0 %v1807
  %1946 = vmatprep.subr.bf16.mxu0 %v1810
  %1947 = vmatpush1.bf16.msra.mxu0 %v1809
  %1948 = vmatprep.subr.bf16.mxu0 %v1812
  %1949 = vmatpush1.bf16.msra.mxu0 %v1811
  %1950 = vmatprep.mubr.bf16.mxu0 %v1492
  %1951 = vmatmul.mubr.bf16.gmra.mrb[0].mxu0 %v1491
  %v1952 = vpop.f32.mrb[0].mxu0
  %v1953 = vadd.f32 %v1912, %v1952
  %v1954 = vpop.f32.mrb[0].mxu0
  %v1955 = vadd.f32 %v1914, %v1954
  %v1956 = vpop.f32.mrb[0].mxu0
  %v1957 = vpop.f32.mrb[0].mxu0
  %1958 = vdwg.mxu0
  %vm1959 = vcmp.ge.f32.partialorder %v1953, 0.0
  %vm1960 = vcmp.ge.f32.partialorder %v1955, 0.0
  %v1961 = vmul.f32 %v1953, 0.2
  %v1962 = vmul.f32 %v1955, 0.2
  %v1963 = vsel %vm1959, %v1953, %v1961
  %v1964 = vsel %vm1960, %v1955, %v1962
  %v1965 = vpack.c.bf16 %v1963, %v1963
  %v1966 = vpack.c.bf16 %v1964, %v1964
  %v1967 = vld [vmem:[%s3] sm:$0xf]
  %v1968 = vld [vmem:[%s3 + $0x4] sm:$0xf]
  %v1969 = vld [vmem:[%s3 + $0x8] sm:$0xf]
  %v1970 = vld [vmem:[%s3 + $0xc] sm:$0xf]
  %v1971 = vld [vmem:[%s3 + $0x10] sm:$0xf]
  %v1972 = vld [vmem:[%s3 + $0x14] sm:$0xf]
  %v1973 = vld [vmem:[%s3 + $0x18] sm:$0xf]
  %v1974 = vld [vmem:[%s3 + $0x1c] sm:$0xf]
  %v1975 = vld [vmem:[%s3 + $0x20] sm:$0xf]
  %v1976 = vld [vmem:[%s3 + $0x24] sm:$0xf]
  %v1977 = vld [vmem:[%s3 + $0x28] sm:$0xf]
  %v1978 = vld [vmem:[%s3 + $0x2c] sm:$0xf]
  %v1979 = vld [vmem:[%s3 + $0x30] sm:$0xf]
  %v1980 = vld [vmem:[%s3 + $0x34] sm:$0xf]
  %v1981 = vld [vmem:[%s3 + $0x38] sm:$0xf]
  %v1982 = vld [vmem:[%s3 + $0x3c] sm:$0xf]
  %v1983 = vld [vmem:[%s3 + $0x40] sm:$0xf]
  %v1984 = vld [vmem:[%s3 + $0x44] sm:$0xf]
  %v1985 = vld [vmem:[%s3 + $0x48] sm:$0xf]
  %v1986 = vld [vmem:[%s3 + $0x4c] sm:$0xf]
  %v1987 = vld [vmem:[%s3 + $0x50] sm:$0xf]
  %v1988 = vld [vmem:[%s3 + $0x54] sm:$0xf]
  %v1989 = vld [vmem:[%s3 + $0x58] sm:$0xf]
  %v1990 = vld [vmem:[%s3 + $0x5c] sm:$0xf]
  %v1991 = vld [vmem:[%s3 + $0x60] sm:$0xf]
  %v1992 = vld [vmem:[%s3 + $0x64] sm:$0xf]
  %v1993 = vld [vmem:[%s3 + $0x68] sm:$0xf]
  %v1994 = vld [vmem:[%s3 + $0x6c] sm:$0xf]
  %v1995 = vld [vmem:[%s3 + $0x70] sm:$0xf]
  %v1996 = vld [vmem:[%s3 + $0x74] sm:$0xf]
  %v1997 = vld [vmem:[%s3 + $0x78] sm:$0xf]
  %v1998 = vld [vmem:[%s3 + $0x7c] sm:$0xf]
  %v2031 = vunpack.c.l.b16 %v1967
  %v2032 = vunpack.c.l.b16 %v1968
  %v2033 = vunpack.c.l.b16 %v1969
  %v2034 = vunpack.c.l.b16 %v1970
  %v2035 = vunpack.c.l.b16 %v1971
  %v2036 = vunpack.c.l.b16 %v1972
  %v2037 = vunpack.c.l.b16 %v1973
  %v2038 = vunpack.c.l.b16 %v1974
  %v2039 = vunpack.c.l.b16 %v1975
  %v2040 = vunpack.c.l.b16 %v1976
  %v2041 = vunpack.c.l.b16 %v1977
  %v2042 = vunpack.c.l.b16 %v1978
  %v2043 = vunpack.c.l.b16 %v1979
  %v2044 = vunpack.c.l.b16 %v1980
  %v2045 = vunpack.c.l.b16 %v1981
  %v2046 = vunpack.c.l.b16 %v1982
  %v2047 = vunpack.c.l.b16 %v1983
  %v2048 = vunpack.c.l.b16 %v1984
  %v2049 = vunpack.c.l.b16 %v1985
  %v2050 = vunpack.c.l.b16 %v1986
  %v2051 = vunpack.c.l.b16 %v1987
  %v2052 = vunpack.c.l.b16 %v1988
  %v2053 = vunpack.c.l.b16 %v1989
  %v2054 = vunpack.c.l.b16 %v1990
  %v2055 = vunpack.c.l.b16 %v1991
  %v2056 = vunpack.c.l.b16 %v1992
  %v2057 = vunpack.c.l.b16 %v1993
  %v2058 = vunpack.c.l.b16 %v1994
  %v2059 = vunpack.c.l.b16 %v1995
  %v2060 = vunpack.c.l.b16 %v1996
  %v2061 = vunpack.c.l.b16 %v1997
  %v2062 = vunpack.c.l.b16 %v1998
  %v2063 = vpack.c.b16 %v2032, %v2031
  %v2064 = vpack.c.b16 %v2034, %v2033
  %v2065 = vpack.c.b16 %v2036, %v2035
  %v2066 = vpack.c.b16 %v2038, %v2037
  %v2067 = vpack.c.b16 %v2040, %v2039
  %v2068 = vpack.c.b16 %v2042, %v2041
  %v2069 = vpack.c.b16 %v2044, %v2043
  %v2070 = vpack.c.b16 %v2046, %v2045
  %v2071 = vpack.c.b16 %v2048, %v2047
  %v2072 = vpack.c.b16 %v2050, %v2049
  %v2073 = vpack.c.b16 %v2052, %v2051
  %v2074 = vpack.c.b16 %v2054, %v2053
  %v2075 = vpack.c.b16 %v2056, %v2055
  %v2076 = vpack.c.b16 %v2058, %v2057
  %v2077 = vpack.c.b16 %v2060, %v2059
  %v2078 = vpack.c.b16 %v2062, %v2061
  %2095 = vmatprep.subr.bf16.mxu0 0
  %2096 = vmatpush1.bf16.msra.mxu0 %v2063
  %2097 = vmatprep.subr.bf16.mxu0 0
  %2098 = vmatpush1.bf16.msra.mxu0 %v2064
  %2099 = vmatprep.subr.bf16.mxu0 0
  %2100 = vmatpush1.bf16.msra.mxu0 %v2065
  %2101 = vmatprep.subr.bf16.mxu0 0
  %2102 = vmatpush1.bf16.msra.mxu0 %v2066
  %2103 = vmatprep.subr.bf16.mxu0 0
  %2104 = vmatpush1.bf16.msra.mxu0 %v2067
  %2105 = vmatprep.subr.bf16.mxu0 0
  %2106 = vmatpush1.bf16.msra.mxu0 %v2068
  %2107 = vmatprep.subr.bf16.mxu0 0
  %2108 = vmatpush1.bf16.msra.mxu0 %v2069
  %2109 = vmatprep.subr.bf16.mxu0 0
  %2110 = vmatpush1.bf16.msra.mxu0 %v2070
  %2111 = vmatprep.subr.bf16.mxu0 0
  %2112 = vmatpush1.bf16.msra.mxu0 %v2071
  %2113 = vmatprep.subr.bf16.mxu0 0
  %2114 = vmatpush1.bf16.msra.mxu0 %v2072
  %2115 = vmatprep.subr.bf16.mxu0 0
  %2116 = vmatpush1.bf16.msra.mxu0 %v2073
  %2117 = vmatprep.subr.bf16.mxu0 0
  %2118 = vmatpush1.bf16.msra.mxu0 %v2074
  %2119 = vmatprep.subr.bf16.mxu0 0
  %2120 = vmatpush1.bf16.msra.mxu0 %v2075
  %2121 = vmatprep.subr.bf16.mxu0 0
  %2122 = vmatpush1.bf16.msra.mxu0 %v2076
  %2123 = vmatprep.subr.bf16.mxu0 0
  %2124 = vmatpush1.bf16.msra.mxu0 %v2077
  %2125 = vmatprep.subr.bf16.mxu0 0
  %2126 = vmatpush1.bf16.msra.mxu0 %v2078
  %2127 = vmatprep.mubr.bf16.mxu0 %v1966
  %2128 = vmatmul.mubr.bf16.gmra.mrb[0].mxu0 %v1965
  %v2129 = vpop.f32.mrb[0].mxu0
  %v2130 = vadd.f32 0.0, %v2129
  %v2131 = vpop.f32.mrb[0].mxu0
  %v2132 = vpop.f32.mrb[0].mxu0
  %v2133 = vpop.f32.mrb[0].mxu0
  %2134 = vdwg.mxu0
  %vm2135 = vcmp.ge.f32.partialorder %v2130, 0.0
  %v2136 = vmul.f32 %v2130, 0.2
  %v2137 = vsel %vm2135, %v2130, %v2136
  %v2138 = vpack.c.bf16 %v2137, %v2137
  %v2139 = vld [vmem:[%s4] sm:$0xf]
  %v2140 = vld [vmem:[%s4 + $0x4] sm:$0xf]
  %v2141 = vld [vmem:[%s4 + $0x8] sm:$0xf]
  %v2142 = vld [vmem:[%s4 + $0xc] sm:$0xf]
  %v2143 = vld [vmem:[%s4 + $0x10] sm:$0xf]
  %v2144 = vld [vmem:[%s4 + $0x14] sm:$0xf]
  %v2145 = vld [vmem:[%s4 + $0x18] sm:$0xf]
  %v2146 = vld [vmem:[%s4 + $0x1c] sm:$0xf]
  %v2147 = vld [vmem:[%s4 + $0x20] sm:$0xf]
  %v2148 = vld [vmem:[%s4 + $0x24] sm:$0xf]
  %v2149 = vld [vmem:[%s4 + $0x28] sm:$0xf]
  %v2150 = vld [vmem:[%s4 + $0x2c] sm:$0xf]
  %v2151 = vld [vmem:[%s4 + $0x30] sm:$0xf]
  %v2152 = vld [vmem:[%s4 + $0x34] sm:$0xf]
  %v2153 = vld [vmem:[%s4 + $0x38] sm:$0xf]
  %v2154 = vld [vmem:[%s4 + $0x3c] sm:$0xf]
  %v2171 = vunpack.c.l.b16 %v2139
  %v2172 = vunpack.c.l.b16 %v2140
  %v2173 = vunpack.c.l.b16 %v2141
  %v2174 = vunpack.c.l.b16 %v2142
  %v2175 = vunpack.c.l.b16 %v2143
  %v2176 = vunpack.c.l.b16 %v2144
  %v2177 = vunpack.c.l.b16 %v2145
  %v2178 = vunpack.c.l.b16 %v2146
  %v2179 = vunpack.c.l.b16 %v2147
  %v2180 = vunpack.c.l.b16 %v2148
  %v2181 = vunpack.c.l.b16 %v2149
  %v2182 = vunpack.c.l.b16 %v2150
  %v2183 = vunpack.c.l.b16 %v2151
  %v2184 = vunpack.c.l.b16 %v2152
  %v2185 = vunpack.c.l.b16 %v2153
  %v2186 = vunpack.c.l.b16 %v2154
  %v2187 = vpack.c.b16 %v2172, %v2171
  %v2188 = vpack.c.b16 %v2174, %v2173
  %v2189 = vpack.c.b16 %v2176, %v2175
  %v2190 = vpack.c.b16 %v2178, %v2177
  %v2191 = vpack.c.b16 %v2180, %v2179
  %v2192 = vpack.c.b16 %v2182, %v2181
  %v2193 = vpack.c.b16 %v2184, %v2183
  %v2194 = vpack.c.b16 %v2186, %v2185
  %2203 = vmatprep.subr.bf16.mxu0 0
  %2204 = vmatpush1.bf16.msra.mxu0 %v2187
  %2205 = vmatprep.subr.bf16.mxu0 0
  %2206 = vmatpush1.bf16.msra.mxu0 %v2188
  %2207 = vmatprep.subr.bf16.mxu0 0
  %2208 = vmatpush1.bf16.msra.mxu0 %v2189
  %2209 = vmatprep.subr.bf16.mxu0 0
  %2210 = vmatpush1.bf16.msra.mxu0 %v2190
  %2211 = vmatprep.subr.bf16.mxu0 0
  %2212 = vmatpush1.bf16.msra.mxu0 %v2191
  %2213 = vmatprep.subr.bf16.mxu0 0
  %2214 = vmatpush1.bf16.msra.mxu0 %v2192
  %2215 = vmatprep.subr.bf16.mxu0 0
  %2216 = vmatpush1.bf16.msra.mxu0 %v2193
  %2217 = vmatprep.subr.bf16.mxu0 0
  %2218 = vmatpush1.bf16.msra.mxu0 %v2194
  %2219 = vmatprep.subr.bf16.mxu0 0
  %2220 = vmatpush1.bf16.msra.mxu0 0
  %2221 = vmatprep.subr.bf16.mxu0 0
  %2222 = vmatpush1.bf16.msra.mxu0 0
  %2223 = vmatprep.subr.bf16.mxu0 0
  %2224 = vmatpush1.bf16.msra.mxu0 0
  %2225 = vmatprep.subr.bf16.mxu0 0
  %2226 = vmatpush1.bf16.msra.mxu0 0
  %2227 = vmatprep.subr.bf16.mxu0 0
  %2228 = vmatpush1.bf16.msra.mxu0 0
  %2229 = vmatprep.subr.bf16.mxu0 0
  %2230 = vmatpush1.bf16.msra.mxu0 0
  %2231 = vmatprep.subr.bf16.mxu0 0
  %2232 = vmatpush1.bf16.msra.mxu0 0
  %2233 = vmatprep.subr.bf16.mxu0 0
  %2234 = vmatpush1.bf16.msra.mxu0 0
  %2235 = vmatprep.mubr.bf16.mxu0 0
  %2236 = vmatmul.mubr.bf16.gmra.mrb[0].mxu0 %v2138
  %v2237 = vpop.f32.mrb[0].mxu0
  %v2238 = vadd.f32 0.0, %v2237
  %v2239 = vpop.f32.mrb[0].mxu0
  %v2240 = vpop.f32.mrb[0].mxu0
  %v2241 = vpop.f32.mrb[0].mxu0
  %2242 = vdwg.mxu0
  %vm2243 = vcmp.ge.f32.partialorder %v2238, 0.0
  %v2244 = vmul.f32 %v2238, 0.2
  %v2245 = vsel %vm2243, %v2238, %v2244
  %v2246 = vpack.c.bf16 %v2245, %v2245
  %v2247 = vld [vmem:[%s5] sm:$0xf]
  %v2248 = vld [vmem:[%s5 + $0x4] sm:$0xf]
  %v2249 = vld [vmem:[%s5 + $0x8] sm:$0xf]
  %v2250 = vld [vmem:[%s5 + $0xc] sm:$0xf]
  %v2251 = vld [vmem:[%s5 + $0x10] sm:$0xf]
  %v2252 = vld [vmem:[%s5 + $0x14] sm:$0xf]
  %v2253 = vld [vmem:[%s5 + $0x18] sm:$0xf]
  %v2254 = vld [vmem:[%s5 + $0x1c] sm:$0xf]
  %v2263 = vunpack.c.l.b16 %v2247
  %v2264 = vunpack.c.l.b16 %v2248
  %v2265 = vunpack.c.l.b16 %v2249
  %v2266 = vunpack.c.l.b16 %v2250
  %v2267 = vunpack.c.l.b16 %v2251
  %v2268 = vunpack.c.l.b16 %v2252
  %v2269 = vunpack.c.l.b16 %v2253
  %v2270 = vunpack.c.l.b16 %v2254
  %v2271 = vpack.c.b16 %v2264, %v2263
  %v2272 = vpack.c.b16 %v2266, %v2265
  %v2273 = vpack.c.b16 %v2268, %v2267
  %v2274 = vpack.c.b16 %v2270, %v2269
  %vm2279 = vcmask 523264
  %v2281 = vsel %vm2279, %v2246, 0
  %2283 = vmatprep.subr.bf16.mxu0 0
  %2284 = vmatpush1.bf16.msra.mxu0 %v2271
  %2285 = vmatprep.subr.bf16.mxu0 0
  %2286 = vmatpush1.bf16.msra.mxu0 %v2272
  %2287 = vmatprep.subr.bf16.mxu0 0
  %2288 = vmatpush1.bf16.msra.mxu0 %v2273
  %2289 = vmatprep.subr.bf16.mxu0 0
  %2290 = vmatpush1.bf16.msra.mxu0 %v2274
  %2291 = vmatprep.subr.bf16.mxu0 0
  %2292 = vmatpush1.bf16.msra.mxu0 0
  %2293 = vmatprep.subr.bf16.mxu0 0
  %2294 = vmatpush1.bf16.msra.mxu0 0
  %2295 = vmatprep.subr.bf16.mxu0 0
  %2296 = vmatpush1.bf16.msra.mxu0 0
  %2297 = vmatprep.subr.bf16.mxu0 0
  %2298 = vmatpush1.bf16.msra.mxu0 0
  %2299 = vmatprep.subr.bf16.mxu0 0
  %2300 = vmatpush1.bf16.msra.mxu0 0
  %2301 = vmatprep.subr.bf16.mxu0 0
  %2302 = vmatpush1.bf16.msra.mxu0 0
  %2303 = vmatprep.subr.bf16.mxu0 0
  %2304 = vmatpush1.bf16.msra.mxu0 0
  %2305 = vmatprep.subr.bf16.mxu0 0
  %2306 = vmatpush1.bf16.msra.mxu0 0
  %2307 = vmatprep.subr.bf16.mxu0 0
  %2308 = vmatpush1.bf16.msra.mxu0 0
  %2309 = vmatprep.subr.bf16.mxu0 0
  %2310 = vmatpush1.bf16.msra.mxu0 0
  %2311 = vmatprep.subr.bf16.mxu0 0
  %2312 = vmatpush1.bf16.msra.mxu0 0
  %2313 = vmatprep.subr.bf16.mxu0 0
  %2314 = vmatpush1.bf16.msra.mxu0 0
  %2315 = vmatprep.mubr.bf16.mxu0 0
  %2316 = vmatmul.mubr.bf16.gmra.mrb[0].mxu0 %v2281
  %v2317 = vpop.f32.mrb[0].mxu0
  %v2318 = vadd.f32 0.0, %v2317
  %v2319 = vpop.f32.mrb[0].mxu0
  %v2320 = vpop.f32.mrb[0].mxu0
  %v2321 = vpop.f32.mrb[0].mxu0
  %2322 = vdwg.mxu0
  %vm2323 = vcmask 1024
  %2324 = vst.msk [vmem:[%s6] sm:$0x3] %vm2323, %v2318
  // Predicated region
  $region26: #{discriminator_forward.1} parent=0 // pred_check
    _
  $region27: #{discriminator_forward.1} parent=0 // pred_check_branch
    %2326 = sbr.rel (0) target = $region29
  $region28: #{discriminator_forward.1} parent=0 // pred_region
    _
  $region29: #{discriminator_forward.1} parent=0 // pred_fallthru
    _
  // Predicated region
  $region30: #{discriminator_forward.1} parent=0 // pred_check
    _
  $region31: #{discriminator_forward.1} parent=0 // pred_check_branch
    %2328 = sbr.rel (0) target = $region33
  $region32: #{discriminator_forward.1} parent=0 // pred_region
    _
  $region33: #{discriminator_forward.1} parent=0 // pred_fallthru
    _

</llo_original>
